<compile_context>
chip_gen: v7x
topology: tpu7x:2x2x1
jax: 0.10.0
libtpu: 0.0.40
codegen_flags: <defaults>
</compile_context>

<pallas_src>
import numpy as np
import jax
import jax.numpy as jnp
from jax.experimental import pallas as pl
from jax.experimental.pallas import tpu as pltpu

# ---------------- model config (mirrors the PyTorch module) ----------------
INPUT_SHAPE = (4, 16, 16)                  # (C, H, W) -> input_dim = 1024 > 50 => MLP backbone
INPUT_DIM = int(np.prod(INPUT_SHAPE))      # 1024
H1, H2, H3 = INPUT_DIM // 2, INPUT_DIM // 4, INPUT_DIM // 8   # 512, 256, 128
N_CLASSES = 10
N_CLASSIFIERS = 5
N_HEADS_TOTAL = 1 + N_CLASSIFIERS          # pred head + ensemble heads
BATCH = 2


def ensemble_kernel(x_ref, w1_ref, b1_ref, w2_ref, b2_ref, w3_ref, b3_ref,
                    wh_ref, bh_ref, out_ref):
    # Backbone MLP: (Linear -> ReLU) x 3.  Matmuls in bf16 on the MXU with f32
    # accumulation; bias-add / ReLU on the VPU in f32.
    h = jnp.dot(x_ref[...], w1_ref[...], preferred_element_type=jnp.float32) + b1_ref[...]
    h = jnp.maximum(h, 0.0).astype(jnp.bfloat16)
    h = jnp.dot(h, w2_ref[...], preferred_element_type=jnp.float32) + b2_ref[...]
    h = jnp.maximum(h, 0.0).astype(jnp.bfloat16)
    f = jnp.dot(h, w3_ref[...], preferred_element_type=jnp.float32) + b3_ref[...]
    f = jnp.maximum(f, 0.0).astype(jnp.bfloat16)          # features, (B, H3) bf16

    # Fused heads: one (B,H3)@(H3, 6*C) matmul, one lane-dense (B, 6*C) store.
    out_ref[...] = jnp.dot(f, wh_ref[...], preferred_element_type=jnp.float32) + bh_ref[...]


def ensemble_classifier(x_flat, params):
    """x_flat: (B, INPUT_DIM) f32.  Returns (pred (B,C) f32, ens (5,B,C) f32)."""
    (w1, b1, w2, b2, w3, b3, wh, bh) = params
    B = x_flat.shape[0]
    x_bf16 = x_flat.astype(jnp.bfloat16)

    vmem_spec = pl.BlockSpec(memory_space=pltpu.MemorySpace.VMEM)
    out_slab = pl.pallas_call(
        ensemble_kernel,
        out_shape=jax.ShapeDtypeStruct((B, N_HEADS_TOTAL * N_CLASSES), jnp.float32),
        in_specs=[vmem_spec] * 9,
        out_specs=vmem_spec,
    )(x_bf16, w1, b1, w2, b2, w3, b3, wh, bh)

    # Layout plumbing (outside the kernel): split the lane-dense slab.
    pred = out_slab[:, :N_CLASSES]                                             # (B, C)
    ens = out_slab[:, N_CLASSES:].reshape(B, N_CLASSIFIERS, N_CLASSES)
    ens = jnp.transpose(ens, (1, 0, 2))                                        # (5, B, C)
    return pred, ens


# ---------------- parameter construction (PyTorch nn.Linear default init) ----------------
def init_linear(key, in_dim, out_dim):
    kw, kb = jax.random.split(key)
    bound = 1.0 / np.sqrt(in_dim)
    w = jax.random.uniform(kw, (in_dim, out_dim), jnp.float32, -bound, bound)  # (in, out)
    b = jax.random.uniform(kb, (1, out_dim), jnp.float32, -bound, bound)
    return w, b


def make_params(key):
    """Returns f32 'master' params and the bf16/fused params fed to the kernel."""
    keys = jax.random.split(key, 4 + N_CLASSIFIERS)
    w1, b1 = init_linear(keys[0], INPUT_DIM, H1)
    w2, b2 = init_linear(keys[1], H1, H2)
    w3, b3 = init_linear(keys[2], H2, H3)
    wp, bp = init_linear(keys[3], H3, N_CLASSES)
    head_ws, head_bs = [], []
    for i in range(N_CLASSIFIERS):
        wi, bi = init_linear(keys[4 + i], H3, N_CLASSES)
        head_ws.append(wi)
        head_bs.append(bi)

    # Fused head slab: columns = [pred | head0 | ... | head4], lane-dense (H3, 60).
    wh = jnp.concatenate([wp] + head_ws, axis=1)           # (H3, 6*C) f32
    bh = jnp.concatenate([bp] + head_bs, axis=1)           # (1, 6*C)  f32

    f32_params = (w1, b1, w2, b2, w3, b3, wp, bp, head_ws, head_bs)
    kernel_params = (w1.astype(jnp.bfloat16), b1,
                     w2.astype(jnp.bfloat16), b2,
                     w3.astype(jnp.bfloat16), b3,
                     wh.astype(jnp.bfloat16), bh)
    return f32_params, kernel_params


# ---------------- references ----------------
def reference_forward_f32(x_flat, f32_params):
    (w1, b1, w2, b2, w3, b3, wp, bp, head_ws, head_bs) = f32_params
    h = jnp.maximum(x_flat @ w1 + b1, 0.0)
    h = jnp.maximum(h @ w2 + b2, 0.0)
    f = jnp.maximum(h @ w3 + b3, 0.0)
    pred = f @ wp + bp
    ens = jnp.stack([f @ head_ws[i] + head_bs[i] for i in range(N_CLASSIFIERS)], axis=0)
    return pred, ens


def reference_forward_bf16(x_flat, kernel_params):
    """Same bf16/f32 mixed-precision recipe as the kernel, in plain JAX."""
    (w1, b1, w2, b2, w3, b3, wh, bh) = kernel_params
    x = x_flat.astype(jnp.bfloat16)
    h = jnp.maximum(jnp.dot(x, w1, preferred_element_type=jnp.float32) + b1, 0.0).astype(jnp.bfloat16)
    h = jnp.maximum(jnp.dot(h, w2, preferred_element_type=jnp.float32) + b2, 0.0).astype(jnp.bfloat16)
    f = jnp.maximum(jnp.dot(h, w3, preferred_element_type=jnp.float32) + b3, 0.0).astype(jnp.bfloat16)
    out = jnp.dot(f, wh, preferred_element_type=jnp.float32) + bh
    pred = out[:, :N_CLASSES]
    ens = jnp.transpose(out[:, N_CLASSES:].reshape(x.shape[0], N_CLASSIFIERS, N_CLASSES), (1, 0, 2))
    return pred, ens


if __name__ == "__main__":
    key = jax.random.PRNGKey(0)
    kx, kp = jax.random.split(key)

    # Input in "NCHW" convention -> flattened exactly as torch.flatten(x, 1).
    x = jax.random.normal(kx, (BATCH,) + INPUT_SHAPE, dtype=jnp.float32)   # (2, 4, 16, 16)
    x_flat = x.reshape(BATCH, -1)                                          # (2, 1024)

    f32_params, kernel_params = make_params(kp)

    pred, ens = ensemble_classifier(x_flat, kernel_params)
    pred = jax.block_until_ready(pred)
    ens = jax.block_until_ready(ens)

    # Tight check vs a plain-JAX reference using the same bf16/f32 recipe.
    pred_b, ens_b = reference_forward_bf16(x_flat, kernel_params)
    assert np.allclose(np.asarray(pred), np.asarray(pred_b), atol=2e-3, rtol=2e-3)
    assert np.allclose(np.asarray(ens), np.asarray(ens_b), atol=2e-3, rtol=2e-3)

    # Loose sanity check vs the full-f32 reference (bf16 weights => ~1% level error).
    pred_f, ens_f = reference_forward_f32(x_flat, f32_params)
    assert np.allclose(np.asarray(pred), np.asarray(pred_f), atol=5e-2, rtol=5e-2)
    assert np.allclose(np.asarray(ens), np.asarray(ens_f), atol=5e-2, rtol=5e-2)

    print("KERNEL_OK")
</pallas_src>

<mosaic_0001>
module attributes {stable_mosaic.version = 11 : i64} {
  func.func @ensemble_kernel(%arg0: memref<2x1024xbf16, #tpu.memory_space<vmem>>, %arg1: memref<1024x512xbf16, #tpu.memory_space<vmem>>, %arg2: memref<1x512xf32, #tpu.memory_space<vmem>>, %arg3: memref<512x256xbf16, #tpu.memory_space<vmem>>, %arg4: memref<1x256xf32, #tpu.memory_space<vmem>>, %arg5: memref<256x128xbf16, #tpu.memory_space<vmem>>, %arg6: memref<1x128xf32, #tpu.memory_space<vmem>>, %arg7: memref<128x60xbf16, #tpu.memory_space<vmem>>, %arg8: memref<1x60xf32, #tpu.memory_space<vmem>>, %arg9: memref<2x60xf32, #tpu.memory_space<vmem>>) attributes {dimension_semantics = [], scalar_prefetch = 0 : i64, scratch_operands = 0 : i64, tpu.core_type = #tpu.core_type<tc>} {
    %c0 = arith.constant 0 : index
    %c0_0 = arith.constant 0 : index
    %0 = vector.load %arg0[%c0, %c0_0] : memref<2x1024xbf16, #tpu.memory_space<vmem>>, vector<2x1024xbf16>
    %c0_1 = arith.constant 0 : index
    %c0_2 = arith.constant 0 : index
    %1 = vector.load %arg1[%c0_1, %c0_2] : memref<1024x512xbf16, #tpu.memory_space<vmem>>, vector<1024x512xbf16>
    %cst = arith.constant dense<0.000000e+00> : vector<2x512xf32>
    %2 = tpu.matmul %0, %1, %cst {dimension_numbers = #tpu.dot_dimension_numbers<[1], [0], [0], [1], [0, 0, 1, 1], [], []>} : vector<2x1024xbf16>, vector<1024x512xbf16>, vector<2x512xf32> -> vector<2x512xf32>
    %c0_3 = arith.constant 0 : index
    %c0_4 = arith.constant 0 : index
    %3 = vector.load %arg2[%c0_3, %c0_4] : memref<1x512xf32, #tpu.memory_space<vmem>>, vector<1x512xf32>
    %4 = vector.broadcast %3 : vector<1x512xf32> to vector<2x512xf32>
    %5 = arith.addf %2, %4 : vector<2x512xf32>
    %cst_5 = arith.constant 0.000000e+00 : f32
    %6 = vector.broadcast %cst_5 : f32 to vector<2x512xf32>
    %7 = arith.maximumf %5, %6 : vector<2x512xf32>
    %8 = arith.truncf %7 : vector<2x512xf32> to vector<2x512xbf16>
    %c0_6 = arith.constant 0 : index
    %c0_7 = arith.constant 0 : index
    %9 = vector.load %arg3[%c0_6, %c0_7] : memref<512x256xbf16, #tpu.memory_space<vmem>>, vector<512x256xbf16>
    %cst_8 = arith.constant dense<0.000000e+00> : vector<2x256xf32>
    %10 = tpu.matmul %8, %9, %cst_8 {dimension_numbers = #tpu.dot_dimension_numbers<[1], [0], [0], [1], [0, 0, 1, 1], [], []>} : vector<2x512xbf16>, vector<512x256xbf16>, vector<2x256xf32> -> vector<2x256xf32>
    %c0_9 = arith.constant 0 : index
    %c0_10 = arith.constant 0 : index
    %11 = vector.load %arg4[%c0_9, %c0_10] : memref<1x256xf32, #tpu.memory_space<vmem>>, vector<1x256xf32>
    %12 = vector.broadcast %11 : vector<1x256xf32> to vector<2x256xf32>
    %13 = arith.addf %10, %12 : vector<2x256xf32>
    %cst_11 = arith.constant 0.000000e+00 : f32
    %14 = vector.broadcast %cst_11 : f32 to vector<2x256xf32>
    %15 = arith.maximumf %13, %14 : vector<2x256xf32>
    %16 = arith.truncf %15 : vector<2x256xf32> to vector<2x256xbf16>
    %c0_12 = arith.constant 0 : index
    %c0_13 = arith.constant 0 : index
    %17 = vector.load %arg5[%c0_12, %c0_13] : memref<256x128xbf16, #tpu.memory_space<vmem>>, vector<256x128xbf16>
    %cst_14 = arith.constant dense<0.000000e+00> : vector<2x128xf32>
    %18 = tpu.matmul %16, %17, %cst_14 {dimension_numbers = #tpu.dot_dimension_numbers<[1], [0], [0], [1], [0, 0, 1, 1], [], []>} : vector<2x256xbf16>, vector<256x128xbf16>, vector<2x128xf32> -> vector<2x128xf32>
    %c0_15 = arith.constant 0 : index
    %c0_16 = arith.constant 0 : index
    %19 = vector.load %arg6[%c0_15, %c0_16] : memref<1x128xf32, #tpu.memory_space<vmem>>, vector<1x128xf32>
    %20 = vector.broadcast %19 : vector<1x128xf32> to vector<2x128xf32>
    %21 = arith.addf %18, %20 : vector<2x128xf32>
    %cst_17 = arith.constant 0.000000e+00 : f32
    %22 = vector.broadcast %cst_17 : f32 to vector<2x128xf32>
    %23 = arith.maximumf %21, %22 : vector<2x128xf32>
    %24 = arith.truncf %23 : vector<2x128xf32> to vector<2x128xbf16>
    %c0_18 = arith.constant 0 : index
    %c0_19 = arith.constant 0 : index
    %25 = vector.load %arg7[%c0_18, %c0_19] : memref<128x60xbf16, #tpu.memory_space<vmem>>, vector<128x60xbf16>
    %cst_20 = arith.constant dense<0.000000e+00> : vector<2x60xf32>
    %26 = tpu.matmul %24, %25, %cst_20 {dimension_numbers = #tpu.dot_dimension_numbers<[1], [0], [0], [1], [0, 0, 1, 1], [], []>} : vector<2x128xbf16>, vector<128x60xbf16>, vector<2x60xf32> -> vector<2x60xf32>
    %c0_21 = arith.constant 0 : index
    %c0_22 = arith.constant 0 : index
    %27 = vector.load %arg8[%c0_21, %c0_22] : memref<1x60xf32, #tpu.memory_space<vmem>>, vector<1x60xf32>
    %28 = vector.broadcast %27 : vector<1x60xf32> to vector<2x60xf32>
    %29 = arith.addf %26, %28 : vector<2x60xf32>
    %c0_23 = arith.constant 0 : index
    %c0_24 = arith.constant 0 : index
    %30 = vector.load %arg9[%c0_23, %c0_24] : memref<2x60xf32, #tpu.memory_space<vmem>>, vector<2x60xf32>
    tpu.vector_store %arg9[%c0_23, %c0_24], %29 {strides = array<i32>} : memref<2x60xf32, #tpu.memory_space<vmem>>, vector<2x60xf32>,
    return
  }
}

</mosaic_0001>

<llo_original>
// kernel: tpu_custom_call.1
$region0: #{tpu_custom_call.1}
  #allocation0 [shape = 'u32[]', space=smem, size = 0x4, offset = 0x4, fixed_abs, tag = 'smem constant byte address 0x4 - core index']
  #allocation1 [shape = 'u32[144,128]{1,0:T(1,128)}', space=vmem, size = 0x12000, scoped, tag = 'internal scratch']
  %s0 = inlined_call_operand.vmem [shape: bf16[2,1024], index: 0, kind: input, shape index: {}]
  %s1 = inlined_call_operand.hbm [shape: bf16[1024,512], index: 1, kind: input, shape index: {}]
  %s2 = inlined_call_operand.vmem [shape: f32[1,512], index: 2, kind: input, shape index: {}]
  %s3 = inlined_call_operand.hbm [shape: bf16[512,256], index: 3, kind: input, shape index: {}]
  %s4 = inlined_call_operand.vmem [shape: f32[1,256], index: 4, kind: input, shape index: {}]
  %s5 = inlined_call_operand.hbm [shape: bf16[256,128], index: 5, kind: input, shape index: {}]
  %s6 = inlined_call_operand.vmem [shape: f32[1,128], index: 6, kind: input, shape index: {}]
  %s7 = inlined_call_operand.vmem [shape: bf16[128,60], index: 7, kind: input, shape index: {}]
  %s8 = inlined_call_operand.vmem [shape: f32[1,60], index: 8, kind: input, shape index: {}]
  %s9 = inlined_call_operand.hbm [shape: f32[2,60], index: 9, kind: output, shape index: {}]
  %s10 = sld [smem:[#allocation0]]
  $region58: #{tpu_custom_call.1} parent=0
    _
  %s12 = ssub.s32 1, %s10
  %s13 = scalar_select 0, %s12, %s10
  $region1: #{tpu_custom_call.1} parent=0
    #allocation2 [shape = 'u8[1048576]{0}', space=vmem, size = 0x100000, scoped, tag = 'input window, operand 1, single buffered']
    #allocation3 [shape = 's32[1]{0}', space=sflag, size = 0x4, scoped, tag = 'scoped memory for tpu_custom_call.1']
    #allocation4 [shape = 's32[1]{0}', space=sflag, size = 0x4, scoped, tag = 'scoped memory for tpu_custom_call.1']
    #allocation5 [shape = 'u8[262144]{0}', space=vmem, size = 0x40000, scoped, tag = 'input window, operand 3, single buffered']
    #allocation6 [shape = 's32[1]{0}', space=sflag, size = 0x4, scoped, tag = 'scoped memory for tpu_custom_call.1']
    #allocation7 [shape = 'u8[65536]{0}', space=vmem, size = 0x10000, scoped, tag = 'input window, operand 5, single buffered']
    #allocation8 [shape = 'u8[1024]{0}', space=vmem, size = 0x400, scoped, tag = 'output window, operand 0, single buffered']
    %14 = vsyncpa [#allocation3], 0
    %15 = vsyncpa [#allocation6], 0
    %16 = vsyncpa [#allocation4], 0
    // Predicated region
    $region2: #{tpu_custom_call.1} parent=1 // pred_check
      _
    $region3: #{tpu_custom_call.1} parent=1 // pred_check_branch
      %18 = sbr.rel (0) target = $region5
    $region4: #{tpu_custom_call.1} parent=1 // pred_region
      _
    $region5: #{tpu_custom_call.1} parent=1 // pred_fallthru
      _
    // Predicated region
    $region6: #{tpu_custom_call.1} parent=1 // pred_check
      _
    $region7: #{tpu_custom_call.1} parent=1 // pred_check_branch
      %20 = sbr.rel (0) target = $region9
    $region8: #{tpu_custom_call.1} parent=1 // pred_region
      %s22 = ssub.s32 32768, 32768
      %23 = vsyncadd [#allocation3], %s22
      %s24 = sshll.u32 [#allocation2], 4
      %s25 = int_to_ptr.vmem [resolvable:$true] %s24
      %30 = dma.hbm_to_vmem [thread:$0]  %s1, 32768, %s25, [#allocation3], 256, 256, 16
    $region9: #{tpu_custom_call.1} parent=1 // pred_fallthru
      _
    // Predicated region
    $region10: #{tpu_custom_call.1} parent=1 // pred_check
      _
    $region11: #{tpu_custom_call.1} parent=1 // pred_check_branch
      %32 = sbr.rel (0) target = $region13
    $region12: #{tpu_custom_call.1} parent=1 // pred_region
      _
    $region13: #{tpu_custom_call.1} parent=1 // pred_fallthru
      _
    // Predicated region
    $region14: #{tpu_custom_call.1} parent=1 // pred_check
      _
    $region15: #{tpu_custom_call.1} parent=1 // pred_check_branch
      %34 = sbr.rel (0) target = $region17
    $region16: #{tpu_custom_call.1} parent=1 // pred_region
      %s36 = ssub.s32 8192, 8192
      %37 = vsyncadd [#allocation6], %s36
      %s38 = sshll.u32 [#allocation5], 4
      %s39 = int_to_ptr.vmem [resolvable:$true] %s38
      %44 = dma.hbm_to_vmem [thread:$0]  %s3, 8192, %s39, [#allocation6], 128, 128, 8
    $region17: #{tpu_custom_call.1} parent=1 // pred_fallthru
      _
    // Predicated region
    $region18: #{tpu_custom_call.1} parent=1 // pred_check
      _
    $region19: #{tpu_custom_call.1} parent=1 // pred_check_branch
      %46 = sbr.rel (0) target = $region21
    $region20: #{tpu_custom_call.1} parent=1 // pred_region
      _
    $region21: #{tpu_custom_call.1} parent=1 // pred_fallthru
      _
    // Predicated region
    $region22: #{tpu_custom_call.1} parent=1 // pred_check
      _
    $region23: #{tpu_custom_call.1} parent=1 // pred_check_branch
      %48 = sbr.rel (0) target = $region25
    $region24: #{tpu_custom_call.1} parent=1 // pred_region
      %s50 = ssub.s32 2048, 2048
      %51 = vsyncadd [#allocation6], %s50
      %s52 = sshll.u32 [#allocation7], 4
      %s53 = int_to_ptr.vmem [resolvable:$true] %s52
      %58 = dma.hbm_to_vmem [thread:$0]  %s5, 2048, %s53, [#allocation6], 64, 64, 4
    $region25: #{tpu_custom_call.1} parent=1 // pred_fallthru
      _
    // Predicated region
    $region26: #{tpu_custom_call.1} parent=1 // pred_check
      _
    $region27: #{tpu_custom_call.1} parent=1 // pred_check_branch
      %60 = sbr.rel (0) target = $region29
    $region28: #{tpu_custom_call.1} parent=1 // pred_region
      _
    $region29: #{tpu_custom_call.1} parent=1 // pred_fallthru
      _
    // Predicated region
    $region30: #{tpu_custom_call.1} parent=1 // pred_check
      _
    $region31: #{tpu_custom_call.1} parent=1 // pred_check_branch
      %62 = sbr.rel (0) target = $region33
    $region32: #{tpu_custom_call.1} parent=1 // pred_region
      _
    $region33: #{tpu_custom_call.1} parent=1 // pred_fallthru
      _
    // Predicated region
    $region34: #{tpu_custom_call.1} parent=1 // pred_check
      _
    $region35: #{tpu_custom_call.1} parent=1 // pred_check_branch
      %64 = sbr.rel (0) target = $region37
    $region36: #{tpu_custom_call.1} parent=1 // pred_region
      _
    $region37: #{tpu_custom_call.1} parent=1 // pred_fallthru
      _
    // Predicated region
    $region38: #{tpu_custom_call.1} parent=1 // pred_check
      _
    $region39: #{tpu_custom_call.1} parent=1 // pred_check_branch
      %66 = sbr.rel (0) target = $region41
    $region40: #{tpu_custom_call.1} parent=1 // pred_region
      %67 = dma.done [#allocation3], 32768
    $region41: #{tpu_custom_call.1} parent=1 // pred_fallthru
      _
    // Predicated region
    $region42: #{tpu_custom_call.1} parent=1 // pred_check
      _
    $region43: #{tpu_custom_call.1} parent=1 // pred_check_branch
      %69 = sbr.rel (0) target = $region45
    $region44: #{tpu_custom_call.1} parent=1 // pred_region
      %70 = dma.done [#allocation6], 8192
    $region45: #{tpu_custom_call.1} parent=1 // pred_fallthru
      _
    // Predicated region
    $region46: #{tpu_custom_call.1} parent=1 // pred_check
      _
    $region47: #{tpu_custom_call.1} parent=1 // pred_check_branch
      %72 = sbr.rel (0) target = $region49
    $region48: #{tpu_custom_call.1} parent=1 // pred_region
      %73 = dma.done [#allocation6], 2048
    $region49: #{tpu_custom_call.1} parent=1 // pred_fallthru
      _
    %v75 = vld [vmem:[%s0] sm:$0xff]
    %v76 = vld [vmem:[#allocation2] sm:$0xff]
    %v77 = vld [vmem:[#allocation2 + $0x8] sm:$0xff]
    %v78 = vld [vmem:[#allocation2 + $0x10] sm:$0xff]
    %v79 = vld [vmem:[#allocation2 + $0x18] sm:$0xff]
    %v80 = vld [vmem:[#allocation2 + $0x20] sm:$0xff]
    %v81 = vld [vmem:[#allocation2 + $0x28] sm:$0xff]
    %v82 = vld [vmem:[#allocation2 + $0x30] sm:$0xff]
    %v83 = vld [vmem:[#allocation2 + $0x38] sm:$0xff]
    %v84 = vld [vmem:[#allocation2 + $0x40] sm:$0xff]
    %v85 = vld [vmem:[#allocation2 + $0x48] sm:$0xff]
    %v86 = vld [vmem:[#allocation2 + $0x50] sm:$0xff]
    %v87 = vld [vmem:[#allocation2 + $0x58] sm:$0xff]
    %v88 = vld [vmem:[#allocation2 + $0x60] sm:$0xff]
    %v89 = vld [vmem:[#allocation2 + $0x68] sm:$0xff]
    %v90 = vld [vmem:[#allocation2 + $0x70] sm:$0xff]
    %v91 = vld [vmem:[#allocation2 + $0x78] sm:$0xff]
    %v92 = vld [vmem:[#allocation2 + $0x80] sm:$0xff]
    %v93 = vld [vmem:[#allocation2 + $0x88] sm:$0xff]
    %v94 = vld [vmem:[#allocation2 + $0x90] sm:$0xff]
    %v95 = vld [vmem:[#allocation2 + $0x98] sm:$0xff]
    %v96 = vld [vmem:[#allocation2 + $0xa0] sm:$0xff]
    %v97 = vld [vmem:[#allocation2 + $0xa8] sm:$0xff]
    %v98 = vld [vmem:[#allocation2 + $0xb0] sm:$0xff]
    %v99 = vld [vmem:[#allocation2 + $0xb8] sm:$0xff]
    %v100 = vld [vmem:[#allocation2 + $0xc0] sm:$0xff]
    %v101 = vld [vmem:[#allocation2 + $0xc8] sm:$0xff]
    %v102 = vld [vmem:[#allocation2 + $0xd0] sm:$0xff]
    %v103 = vld [vmem:[#allocation2 + $0xd8] sm:$0xff]
    %v104 = vld [vmem:[#allocation2 + $0xe0] sm:$0xff]
    %v105 = vld [vmem:[#allocation2 + $0xe8] sm:$0xff]
    %v106 = vld [vmem:[#allocation2 + $0xf0] sm:$0xff]
    %v107 = vld [vmem:[#allocation2 + $0xf8] sm:$0xff]
    %v108 = vld [vmem:[#allocation2 + $0x100] sm:$0xff]
    %v109 = vld [vmem:[#allocation2 + $0x108] sm:$0xff]
    %v110 = vld [vmem:[#allocation2 + $0x110] sm:$0xff]
    %v111 = vld [vmem:[#allocation2 + $0x118] sm:$0xff]
    %v112 = vld [vmem:[#allocation2 + $0x120] sm:$0xff]
    %v113 = vld [vmem:[#allocation2 + $0x128] sm:$0xff]
    %v114 = vld [vmem:[#allocation2 + $0x130] sm:$0xff]
    %v115 = vld [vmem:[#allocation2 + $0x138] sm:$0xff]
    %v116 = vld [vmem:[#allocation2 + $0x140] sm:$0xff]
    %v117 = vld [vmem:[#allocation2 + $0x148] sm:$0xff]
    %v118 = vld [vmem:[#allocation2 + $0x150] sm:$0xff]
    %v119 = vld [vmem:[#allocation2 + $0x158] sm:$0xff]
    %v120 = vld [vmem:[#allocation2 + $0x160] sm:$0xff]
    %v121 = vld [vmem:[#allocation2 + $0x168] sm:$0xff]
    %v122 = vld [vmem:[#allocation2 + $0x170] sm:$0xff]
    %v123 = vld [vmem:[#allocation2 + $0x178] sm:$0xff]
    %v124 = vld [vmem:[#allocation2 + $0x180] sm:$0xff]
    %v125 = vld [vmem:[#allocation2 + $0x188] sm:$0xff]
    %v126 = vld [vmem:[#allocation2 + $0x190] sm:$0xff]
    %v127 = vld [vmem:[#allocation2 + $0x198] sm:$0xff]
    %v128 = vld [vmem:[#allocation2 + $0x1a0] sm:$0xff]
    %v129 = vld [vmem:[#allocation2 + $0x1a8] sm:$0xff]
    %v130 = vld [vmem:[#allocation2 + $0x1b0] sm:$0xff]
    %v131 = vld [vmem:[#allocation2 + $0x1b8] sm:$0xff]
    %v132 = vld [vmem:[#allocation2 + $0x1c0] sm:$0xff]
    %v133 = vld [vmem:[#allocation2 + $0x1c8] sm:$0xff]
    %v134 = vld [vmem:[#allocation2 + $0x1d0] sm:$0xff]
    %v135 = vld [vmem:[#allocation2 + $0x1d8] sm:$0xff]
    %v136 = vld [vmem:[#allocation2 + $0x1e0] sm:$0xff]
    %v137 = vld [vmem:[#allocation2 + $0x1e8] sm:$0xff]
    %v138 = vld [vmem:[#allocation2 + $0x1f0] sm:$0xff]
    %v139 = vld [vmem:[#allocation2 + $0x1f8] sm:$0xff]
    %v140 = vld [vmem:[#allocation2 + $0x200] sm:$0xff]
    %v141 = vld [vmem:[#allocation2 + $0x208] sm:$0xff]
    %v142 = vld [vmem:[#allocation2 + $0x210] sm:$0xff]
    %v143 = vld [vmem:[#allocation2 + $0x218] sm:$0xff]
    %v144 = vld [vmem:[#allocation2 + $0x220] sm:$0xff]
    %v145 = vld [vmem:[#allocation2 + $0x228] sm:$0xff]
    %v146 = vld [vmem:[#allocation2 + $0x230] sm:$0xff]
    %v147 = vld [vmem:[#allocation2 + $0x238] sm:$0xff]
    %v148 = vld [vmem:[#allocation2 + $0x240] sm:$0xff]
    %v149 = vld [vmem:[#allocation2 + $0x248] sm:$0xff]
    %v150 = vld [vmem:[#allocation2 + $0x250] sm:$0xff]
    %v151 = vld [vmem:[#allocation2 + $0x258] sm:$0xff]
    %v152 = vld [vmem:[#allocation2 + $0x260] sm:$0xff]
    %v153 = vld [vmem:[#allocation2 + $0x268] sm:$0xff]
    %v154 = vld [vmem:[#allocation2 + $0x270] sm:$0xff]
    %v155 = vld [vmem:[#allocation2 + $0x278] sm:$0xff]
    %v156 = vld [vmem:[#allocation2 + $0x280] sm:$0xff]
    %v157 = vld [vmem:[#allocation2 + $0x288] sm:$0xff]
    %v158 = vld [vmem:[#allocation2 + $0x290] sm:$0xff]
    %v159 = vld [vmem:[#allocation2 + $0x298] sm:$0xff]
    %v160 = vld [vmem:[#allocation2 + $0x2a0] sm:$0xff]
    %v161 = vld [vmem:[#allocation2 + $0x2a8] sm:$0xff]
    %v162 = vld [vmem:[#allocation2 + $0x2b0] sm:$0xff]
    %v163 = vld [vmem:[#allocation2 + $0x2b8] sm:$0xff]
    %v164 = vld [vmem:[#allocation2 + $0x2c0] sm:$0xff]
    %v165 = vld [vmem:[#allocation2 + $0x2c8] sm:$0xff]
    %v166 = vld [vmem:[#allocation2 + $0x2d0] sm:$0xff]
    %v167 = vld [vmem:[#allocation2 + $0x2d8] sm:$0xff]
    %v168 = vld [vmem:[#allocation2 + $0x2e0] sm:$0xff]
    %v169 = vld [vmem:[#allocation2 + $0x2e8] sm:$0xff]
    %v170 = vld [vmem:[#allocation2 + $0x2f0] sm:$0xff]
    %v171 = vld [vmem:[#allocation2 + $0x2f8] sm:$0xff]
    %v172 = vld [vmem:[#allocation2 + $0x300] sm:$0xff]
    %v173 = vld [vmem:[#allocation2 + $0x308] sm:$0xff]
    %v174 = vld [vmem:[#allocation2 + $0x310] sm:$0xff]
    %v175 = vld [vmem:[#allocation2 + $0x318] sm:$0xff]
    %v176 = vld [vmem:[#allocation2 + $0x320] sm:$0xff]
    %v177 = vld [vmem:[#allocation2 + $0x328] sm:$0xff]
    %v178 = vld [vmem:[#allocation2 + $0x330] sm:$0xff]
    %v179 = vld [vmem:[#allocation2 + $0x338] sm:$0xff]
    %v180 = vld [vmem:[#allocation2 + $0x340] sm:$0xff]
    %v181 = vld [vmem:[#allocation2 + $0x348] sm:$0xff]
    %v182 = vld [vmem:[#allocation2 + $0x350] sm:$0xff]
    %v183 = vld [vmem:[#allocation2 + $0x358] sm:$0xff]
    %v184 = vld [vmem:[#allocation2 + $0x360] sm:$0xff]
    %v185 = vld [vmem:[#allocation2 + $0x368] sm:$0xff]
    %v186 = vld [vmem:[#allocation2 + $0x370] sm:$0xff]
    %v187 = vld [vmem:[#allocation2 + $0x378] sm:$0xff]
    %v188 = vld [vmem:[#allocation2 + $0x380] sm:$0xff]
    %v189 = vld [vmem:[#allocation2 + $0x388] sm:$0xff]
    %v190 = vld [vmem:[#allocation2 + $0x390] sm:$0xff]
    %v191 = vld [vmem:[#allocation2 + $0x398] sm:$0xff]
    %v192 = vld [vmem:[#allocation2 + $0x3a0] sm:$0xff]
    %v193 = vld [vmem:[#allocation2 + $0x3a8] sm:$0xff]
    %v194 = vld [vmem:[#allocation2 + $0x3b0] sm:$0xff]
    %v195 = vld [vmem:[#allocation2 + $0x3b8] sm:$0xff]
    %v196 = vld [vmem:[#allocation2 + $0x3c0] sm:$0xff]
    %v197 = vld [vmem:[#allocation2 + $0x3c8] sm:$0xff]
    %v198 = vld [vmem:[#allocation2 + $0x3d0] sm:$0xff]
    %v199 = vld [vmem:[#allocation2 + $0x3d8] sm:$0xff]
    %v200 = vld [vmem:[#allocation2 + $0x3e0] sm:$0xff]
    %v201 = vld [vmem:[#allocation2 + $0x3e8] sm:$0xff]
    %v202 = vld [vmem:[#allocation2 + $0x3f0] sm:$0xff]
    %v203 = vld [vmem:[#allocation2 + $0x3f8] sm:$0xff]
    %v204 = vld [vmem:[#allocation2 + $0x400] sm:$0xff]
    %v205 = vld [vmem:[#allocation2 + $0x408] sm:$0xff]
    %v206 = vld [vmem:[#allocation2 + $0x410] sm:$0xff]
    %v207 = vld [vmem:[#allocation2 + $0x418] sm:$0xff]
    %v208 = vld [vmem:[#allocation2 + $0x420] sm:$0xff]
    %v209 = vld [vmem:[#allocation2 + $0x428] sm:$0xff]
    %v210 = vld [vmem:[#allocation2 + $0x430] sm:$0xff]
    %v211 = vld [vmem:[#allocation2 + $0x438] sm:$0xff]
    %v212 = vld [vmem:[#allocation2 + $0x440] sm:$0xff]
    %v213 = vld [vmem:[#allocation2 + $0x448] sm:$0xff]
    %v214 = vld [vmem:[#allocation2 + $0x450] sm:$0xff]
    %v215 = vld [vmem:[#allocation2 + $0x458] sm:$0xff]
    %v216 = vld [vmem:[#allocation2 + $0x460] sm:$0xff]
    %v217 = vld [vmem:[#allocation2 + $0x468] sm:$0xff]
    %v218 = vld [vmem:[#allocation2 + $0x470] sm:$0xff]
    %v219 = vld [vmem:[#allocation2 + $0x478] sm:$0xff]
    %v220 = vld [vmem:[#allocation2 + $0x480] sm:$0xff]
    %v221 = vld [vmem:[#allocation2 + $0x488] sm:$0xff]
    %v222 = vld [vmem:[#allocation2 + $0x490] sm:$0xff]
    %v223 = vld [vmem:[#allocation2 + $0x498] sm:$0xff]
    %v224 = vld [vmem:[#allocation2 + $0x4a0] sm:$0xff]
    %v225 = vld [vmem:[#allocation2 + $0x4a8] sm:$0xff]
    %v226 = vld [vmem:[#allocation2 + $0x4b0] sm:$0xff]
    %v227 = vld [vmem:[#allocation2 + $0x4b8] sm:$0xff]
    %v228 = vld [vmem:[#allocation2 + $0x4c0] sm:$0xff]
    %v229 = vld [vmem:[#allocation2 + $0x4c8] sm:$0xff]
    %v230 = vld [vmem:[#allocation2 + $0x4d0] sm:$0xff]
    %v231 = vld [vmem:[#allocation2 + $0x4d8] sm:$0xff]
    %v232 = vld [vmem:[#allocation2 + $0x4e0] sm:$0xff]
    %v233 = vld [vmem:[#allocation2 + $0x4e8] sm:$0xff]
    %v234 = vld [vmem:[#allocation2 + $0x4f0] sm:$0xff]
    %v235 = vld [vmem:[#allocation2 + $0x4f8] sm:$0xff]
    %v236 = vld [vmem:[#allocation2 + $0x500] sm:$0xff]
    %v237 = vld [vmem:[#allocation2 + $0x508] sm:$0xff]
    %v238 = vld [vmem:[#allocation2 + $0x510] sm:$0xff]
    %v239 = vld [vmem:[#allocation2 + $0x518] sm:$0xff]
    %v240 = vld [vmem:[#allocation2 + $0x520] sm:$0xff]
    %v241 = vld [vmem:[#allocation2 + $0x528] sm:$0xff]
    %v242 = vld [vmem:[#allocation2 + $0x530] sm:$0xff]
    %v243 = vld [vmem:[#allocation2 + $0x538] sm:$0xff]
    %v244 = vld [vmem:[#allocation2 + $0x540] sm:$0xff]
    %v245 = vld [vmem:[#allocation2 + $0x548] sm:$0xff]
    %v246 = vld [vmem:[#allocation2 + $0x550] sm:$0xff]
    %v247 = vld [vmem:[#allocation2 + $0x558] sm:$0xff]
    %v248 = vld [vmem:[#allocation2 + $0x560] sm:$0xff]
    %v249 = vld [vmem:[#allocation2 + $0x568] sm:$0xff]
    %v250 = vld [vmem:[#allocation2 + $0x570] sm:$0xff]
    %v251 = vld [vmem:[#allocation2 + $0x578] sm:$0xff]
    %v252 = vld [vmem:[#allocation2 + $0x580] sm:$0xff]
    %v253 = vld [vmem:[#allocation2 + $0x588] sm:$0xff]
    %v254 = vld [vmem:[#allocation2 + $0x590] sm:$0xff]
    %v255 = vld [vmem:[#allocation2 + $0x598] sm:$0xff]
    %v256 = vld [vmem:[#allocation2 + $0x5a0] sm:$0xff]
    %v257 = vld [vmem:[#allocation2 + $0x5a8] sm:$0xff]
    %v258 = vld [vmem:[#allocation2 + $0x5b0] sm:$0xff]
    %v259 = vld [vmem:[#allocation2 + $0x5b8] sm:$0xff]
    %v260 = vld [vmem:[#allocation2 + $0x5c0] sm:$0xff]
    %v261 = vld [vmem:[#allocation2 + $0x5c8] sm:$0xff]
    %v262 = vld [vmem:[#allocation2 + $0x5d0] sm:$0xff]
    %v263 = vld [vmem:[#allocation2 + $0x5d8] sm:$0xff]
    %v264 = vld [vmem:[#allocation2 + $0x5e0] sm:$0xff]
    %v265 = vld [vmem:[#allocation2 + $0x5e8] sm:$0xff]
    %v266 = vld [vmem:[#allocation2 + $0x5f0] sm:$0xff]
    %v267 = vld [vmem:[#allocation2 + $0x5f8] sm:$0xff]
    %v268 = vld [vmem:[#allocation2 + $0x600] sm:$0xff]
    %v269 = vld [vmem:[#allocation2 + $0x608] sm:$0xff]
    %v270 = vld [vmem:[#allocation2 + $0x610] sm:$0xff]
    %v271 = vld [vmem:[#allocation2 + $0x618] sm:$0xff]
    %v272 = vld [vmem:[#allocation2 + $0x620] sm:$0xff]
    %v273 = vld [vmem:[#allocation2 + $0x628] sm:$0xff]
    %v274 = vld [vmem:[#allocation2 + $0x630] sm:$0xff]
    %v275 = vld [vmem:[#allocation2 + $0x638] sm:$0xff]
    %v276 = vld [vmem:[#allocation2 + $0x640] sm:$0xff]
    %v277 = vld [vmem:[#allocation2 + $0x648] sm:$0xff]
    %v278 = vld [vmem:[#allocation2 + $0x650] sm:$0xff]
    %v279 = vld [vmem:[#allocation2 + $0x658] sm:$0xff]
    %v280 = vld [vmem:[#allocation2 + $0x660] sm:$0xff]
    %v281 = vld [vmem:[#allocation2 + $0x668] sm:$0xff]
    %v282 = vld [vmem:[#allocation2 + $0x670] sm:$0xff]
    %v283 = vld [vmem:[#allocation2 + $0x678] sm:$0xff]
    %v284 = vld [vmem:[#allocation2 + $0x680] sm:$0xff]
    %v285 = vld [vmem:[#allocation2 + $0x688] sm:$0xff]
    %v286 = vld [vmem:[#allocation2 + $0x690] sm:$0xff]
    %v287 = vld [vmem:[#allocation2 + $0x698] sm:$0xff]
    %v288 = vld [vmem:[#allocation2 + $0x6a0] sm:$0xff]
    %v289 = vld [vmem:[#allocation2 + $0x6a8] sm:$0xff]
    %v290 = vld [vmem:[#allocation2 + $0x6b0] sm:$0xff]
    %v291 = vld [vmem:[#allocation2 + $0x6b8] sm:$0xff]
    %v292 = vld [vmem:[#allocation2 + $0x6c0] sm:$0xff]
    %v293 = vld [vmem:[#allocation2 + $0x6c8] sm:$0xff]
    %v294 = vld [vmem:[#allocation2 + $0x6d0] sm:$0xff]
    %v295 = vld [vmem:[#allocation2 + $0x6d8] sm:$0xff]
    %v296 = vld [vmem:[#allocation2 + $0x6e0] sm:$0xff]
    %v297 = vld [vmem:[#allocation2 + $0x6e8] sm:$0xff]
    %v298 = vld [vmem:[#allocation2 + $0x6f0] sm:$0xff]
    %v299 = vld [vmem:[#allocation2 + $0x6f8] sm:$0xff]
    %v300 = vld [vmem:[#allocation2 + $0x700] sm:$0xff]
    %v301 = vld [vmem:[#allocation2 + $0x708] sm:$0xff]
    %v302 = vld [vmem:[#allocation2 + $0x710] sm:$0xff]
    %v303 = vld [vmem:[#allocation2 + $0x718] sm:$0xff]
    %v304 = vld [vmem:[#allocation2 + $0x720] sm:$0xff]
    %v305 = vld [vmem:[#allocation2 + $0x728] sm:$0xff]
    %v306 = vld [vmem:[#allocation2 + $0x730] sm:$0xff]
    %v307 = vld [vmem:[#allocation2 + $0x738] sm:$0xff]
    %v308 = vld [vmem:[#allocation2 + $0x740] sm:$0xff]
    %v309 = vld [vmem:[#allocation2 + $0x748] sm:$0xff]
    %v310 = vld [vmem:[#allocation2 + $0x750] sm:$0xff]
    %v311 = vld [vmem:[#allocation2 + $0x758] sm:$0xff]
    %v312 = vld [vmem:[#allocation2 + $0x760] sm:$0xff]
    %v313 = vld [vmem:[#allocation2 + $0x768] sm:$0xff]
    %v314 = vld [vmem:[#allocation2 + $0x770] sm:$0xff]
    %v315 = vld [vmem:[#allocation2 + $0x778] sm:$0xff]
    %v316 = vld [vmem:[#allocation2 + $0x780] sm:$0xff]
    %v317 = vld [vmem:[#allocation2 + $0x788] sm:$0xff]
    %v318 = vld [vmem:[#allocation2 + $0x790] sm:$0xff]
    %v319 = vld [vmem:[#allocation2 + $0x798] sm:$0xff]
    %v320 = vld [vmem:[#allocation2 + $0x7a0] sm:$0xff]
    %v321 = vld [vmem:[#allocation2 + $0x7a8] sm:$0xff]
    %v322 = vld [vmem:[#allocation2 + $0x7b0] sm:$0xff]
    %v323 = vld [vmem:[#allocation2 + $0x7b8] sm:$0xff]
    %v324 = vld [vmem:[#allocation2 + $0x7c0] sm:$0xff]
    %v325 = vld [vmem:[#allocation2 + $0x7c8] sm:$0xff]
    %v326 = vld [vmem:[#allocation2 + $0x7d0] sm:$0xff]
    %v327 = vld [vmem:[#allocation2 + $0x7d8] sm:$0xff]
    %v328 = vld [vmem:[#allocation2 + $0x7e0] sm:$0xff]
    %v329 = vld [vmem:[#allocation2 + $0x7e8] sm:$0xff]
    %v330 = vld [vmem:[#allocation2 + $0x7f0] sm:$0xff]
    %v331 = vld [vmem:[#allocation2 + $0x7f8] sm:$0xff]
    %v332 = vld [vmem:[%s2] sm:$0xf]
    %v334 = vlaneseq
    %v335 = vshrl.u32 %v334, 7
    %v336 = vsub.s32 0, %v335
    %v337 = vrot.slane %v332, %v336
    %v338 = vlaneseq
    %v339 = vshrl.u32 %v338, 7
    %v340 = vsub.s32 1, %v339
    %v341 = vrot.slane %v332, %v340
    %v342 = vlaneseq
    %v343 = vshrl.u32 %v342, 7
    %v344 = vsub.s32 2, %v343
    %v345 = vrot.slane %v332, %v344
    %v346 = vlaneseq
    %v347 = vshrl.u32 %v346, 7
    %v348 = vsub.s32 3, %v347
    %v349 = vrot.slane %v332, %v348
    %v355 = vcombine.high %v75, %v75
    %v357 = vunpack.c.l.s4 1966171168
    %v358 = vunpack.c.0.s8 %v357
    %v359 = vlaneseq
    %v360 = vshrl.u32 %v359, 7
    %v361 = vsub.s32 %v358, %v360
    %v362 = vrot.slane %v75, %v361
    %v364 = vunpack.c.l.s4 1966171168
    %v365 = vunpack.c.0.s8 %v364
    %v366 = vlaneseq
    %v367 = vshrl.u32 %v366, 7
    %v368 = vsub.s32 %v365, %v367
    %v369 = vrot.slane %v355, %v368
    %v370 = vcombine.high %v362, %v362
    %v371 = vcombine.high %v369, %v369
    %v373 = vunpack.c.l.s4 1966171168
    %v374 = vunpack.c.0.s8 %v373
    %v375 = vlaneseq
    %v376 = vshrl.u32 %v375, 7
    %v377 = vsub.s32 %v374, %v376
    %v378 = vrot.slane %v362, %v377
    %v380 = vunpack.c.l.s4 1966171168
    %v381 = vunpack.c.0.s8 %v380
    %v382 = vlaneseq
    %v383 = vshrl.u32 %v382, 7
    %v384 = vsub.s32 %v381, %v383
    %v385 = vrot.slane %v369, %v384
    %v387 = vunpack.c.l.s4 1966171168
    %v388 = vunpack.c.0.s8 %v387
    %v389 = vlaneseq
    %v390 = vshrl.u32 %v389, 7
    %v391 = vsub.s32 %v388, %v390
    %v392 = vrot.slane %v370, %v391
    %v394 = vunpack.c.l.s4 1966171168
    %v395 = vunpack.c.0.s8 %v394
    %v396 = vlaneseq
    %v397 = vshrl.u32 %v396, 7
    %v398 = vsub.s32 %v395, %v397
    %v399 = vrot.slane %v371, %v398
    %v400 = vcombine.high %v378, %v378
    %v401 = vcombine.high %v385, %v385
    %v402 = vcombine.high %v392, %v392
    %v403 = vcombine.high %v399, %v399
    %v668 = vunpack.c.l.b16 %v76
    %v669 = vunpack.c.h.b16 %v76
    %v670 = vunpack.c.l.b16 %v77
    %v671 = vunpack.c.h.b16 %v77
    %v672 = vunpack.c.l.b16 %v78
    %v673 = vunpack.c.h.b16 %v78
    %v674 = vunpack.c.l.b16 %v79
    %v675 = vunpack.c.h.b16 %v79
    %v676 = vunpack.c.l.b16 %v80
    %v677 = vunpack.c.h.b16 %v80
    %v678 = vunpack.c.l.b16 %v81
    %v679 = vunpack.c.h.b16 %v81
    %v680 = vunpack.c.l.b16 %v82
    %v681 = vunpack.c.h.b16 %v82
    %v682 = vunpack.c.l.b16 %v83
    %v683 = vunpack.c.h.b16 %v83
    %v684 = vunpack.c.l.b16 %v84
    %v685 = vunpack.c.h.b16 %v84
    %v686 = vunpack.c.l.b16 %v85
    %v687 = vunpack.c.h.b16 %v85
    %v688 = vunpack.c.l.b16 %v86
    %v689 = vunpack.c.h.b16 %v86
    %v690 = vunpack.c.l.b16 %v87
    %v691 = vunpack.c.h.b16 %v87
    %v692 = vunpack.c.l.b16 %v88
    %v693 = vunpack.c.h.b16 %v88
    %v694 = vunpack.c.l.b16 %v89
    %v695 = vunpack.c.h.b16 %v89
    %v696 = vunpack.c.l.b16 %v90
    %v697 = vunpack.c.h.b16 %v90
    %v698 = vunpack.c.l.b16 %v91
    %v699 = vunpack.c.h.b16 %v91
    %v700 = vunpack.c.l.b16 %v92
    %v701 = vunpack.c.h.b16 %v92
    %v702 = vunpack.c.l.b16 %v93
    %v703 = vunpack.c.h.b16 %v93
    %v704 = vunpack.c.l.b16 %v94
    %v705 = vunpack.c.h.b16 %v94
    %v706 = vunpack.c.l.b16 %v95
    %v707 = vunpack.c.h.b16 %v95
    %v708 = vunpack.c.l.b16 %v96
    %v709 = vunpack.c.h.b16 %v96
    %v710 = vunpack.c.l.b16 %v97
    %v711 = vunpack.c.h.b16 %v97
    %v712 = vunpack.c.l.b16 %v98
    %v713 = vunpack.c.h.b16 %v98
    %v714 = vunpack.c.l.b16 %v99
    %v715 = vunpack.c.h.b16 %v99
    %v716 = vunpack.c.l.b16 %v100
    %v717 = vunpack.c.h.b16 %v100
    %v718 = vunpack.c.l.b16 %v101
    %v719 = vunpack.c.h.b16 %v101
    %v720 = vunpack.c.l.b16 %v102
    %v721 = vunpack.c.h.b16 %v102
    %v722 = vunpack.c.l.b16 %v103
    %v723 = vunpack.c.h.b16 %v103
    %v724 = vunpack.c.l.b16 %v104
    %v725 = vunpack.c.h.b16 %v104
    %v726 = vunpack.c.l.b16 %v105
    %v727 = vunpack.c.h.b16 %v105
    %v728 = vunpack.c.l.b16 %v106
    %v729 = vunpack.c.h.b16 %v106
    %v730 = vunpack.c.l.b16 %v107
    %v731 = vunpack.c.h.b16 %v107
    %v732 = vunpack.c.l.b16 %v108
    %v733 = vunpack.c.h.b16 %v108
    %v734 = vunpack.c.l.b16 %v109
    %v735 = vunpack.c.h.b16 %v109
    %v736 = vunpack.c.l.b16 %v110
    %v737 = vunpack.c.h.b16 %v110
    %v738 = vunpack.c.l.b16 %v111
    %v739 = vunpack.c.h.b16 %v111
    %v740 = vunpack.c.l.b16 %v112
    %v741 = vunpack.c.h.b16 %v112
    %v742 = vunpack.c.l.b16 %v113
    %v743 = vunpack.c.h.b16 %v113
    %v744 = vunpack.c.l.b16 %v114
    %v745 = vunpack.c.h.b16 %v114
    %v746 = vunpack.c.l.b16 %v115
    %v747 = vunpack.c.h.b16 %v115
    %v748 = vunpack.c.l.b16 %v116
    %v749 = vunpack.c.h.b16 %v116
    %v750 = vunpack.c.l.b16 %v117
    %v751 = vunpack.c.h.b16 %v117
    %v752 = vunpack.c.l.b16 %v118
    %v753 = vunpack.c.h.b16 %v118
    %v754 = vunpack.c.l.b16 %v119
    %v755 = vunpack.c.h.b16 %v119
    %v756 = vunpack.c.l.b16 %v120
    %v757 = vunpack.c.h.b16 %v120
    %v758 = vunpack.c.l.b16 %v121
    %v759 = vunpack.c.h.b16 %v121
    %v760 = vunpack.c.l.b16 %v122
    %v761 = vunpack.c.h.b16 %v122
    %v762 = vunpack.c.l.b16 %v123
    %v763 = vunpack.c.h.b16 %v123
    %v764 = vunpack.c.l.b16 %v124
    %v765 = vunpack.c.h.b16 %v124
    %v766 = vunpack.c.l.b16 %v125
    %v767 = vunpack.c.h.b16 %v125
    %v768 = vunpack.c.l.b16 %v126
    %v769 = vunpack.c.h.b16 %v126
    %v770 = vunpack.c.l.b16 %v127
    %v771 = vunpack.c.h.b16 %v127
    %v772 = vunpack.c.l.b16 %v128
    %v773 = vunpack.c.h.b16 %v128
    %v774 = vunpack.c.l.b16 %v129
    %v775 = vunpack.c.h.b16 %v129
    %v776 = vunpack.c.l.b16 %v130
    %v777 = vunpack.c.h.b16 %v130
    %v778 = vunpack.c.l.b16 %v131
    %v779 = vunpack.c.h.b16 %v131
    %v780 = vunpack.c.l.b16 %v132
    %v781 = vunpack.c.h.b16 %v132
    %v782 = vunpack.c.l.b16 %v133
    %v783 = vunpack.c.h.b16 %v133
    %v784 = vunpack.c.l.b16 %v134
    %v785 = vunpack.c.h.b16 %v134
    %v786 = vunpack.c.l.b16 %v135
    %v787 = vunpack.c.h.b16 %v135
    %v788 = vunpack.c.l.b16 %v136
    %v789 = vunpack.c.h.b16 %v136
    %v790 = vunpack.c.l.b16 %v137
    %v791 = vunpack.c.h.b16 %v137
    %v792 = vunpack.c.l.b16 %v138
    %v793 = vunpack.c.h.b16 %v138
    %v794 = vunpack.c.l.b16 %v139
    %v795 = vunpack.c.h.b16 %v139
    %v796 = vunpack.c.l.b16 %v140
    %v797 = vunpack.c.h.b16 %v140
    %v798 = vunpack.c.l.b16 %v141
    %v799 = vunpack.c.h.b16 %v141
    %v800 = vunpack.c.l.b16 %v142
    %v801 = vunpack.c.h.b16 %v142
    %v802 = vunpack.c.l.b16 %v143
    %v803 = vunpack.c.h.b16 %v143
    %v804 = vunpack.c.l.b16 %v144
    %v805 = vunpack.c.h.b16 %v144
    %v806 = vunpack.c.l.b16 %v145
    %v807 = vunpack.c.h.b16 %v145
    %v808 = vunpack.c.l.b16 %v146
    %v809 = vunpack.c.h.b16 %v146
    %v810 = vunpack.c.l.b16 %v147
    %v811 = vunpack.c.h.b16 %v147
    %v812 = vunpack.c.l.b16 %v148
    %v813 = vunpack.c.h.b16 %v148
    %v814 = vunpack.c.l.b16 %v149
    %v815 = vunpack.c.h.b16 %v149
    %v816 = vunpack.c.l.b16 %v150
    %v817 = vunpack.c.h.b16 %v150
    %v818 = vunpack.c.l.b16 %v151
    %v819 = vunpack.c.h.b16 %v151
    %v820 = vunpack.c.l.b16 %v152
    %v821 = vunpack.c.h.b16 %v152
    %v822 = vunpack.c.l.b16 %v153
    %v823 = vunpack.c.h.b16 %v153
    %v824 = vunpack.c.l.b16 %v154
    %v825 = vunpack.c.h.b16 %v154
    %v826 = vunpack.c.l.b16 %v155
    %v827 = vunpack.c.h.b16 %v155
    %v828 = vunpack.c.l.b16 %v156
    %v829 = vunpack.c.h.b16 %v156
    %v830 = vunpack.c.l.b16 %v157
    %v831 = vunpack.c.h.b16 %v157
    %v832 = vunpack.c.l.b16 %v158
    %v833 = vunpack.c.h.b16 %v158
    %v834 = vunpack.c.l.b16 %v159
    %v835 = vunpack.c.h.b16 %v159
    %v836 = vunpack.c.l.b16 %v160
    %v837 = vunpack.c.h.b16 %v160
    %v838 = vunpack.c.l.b16 %v161
    %v839 = vunpack.c.h.b16 %v161
    %v840 = vunpack.c.l.b16 %v162
    %v841 = vunpack.c.h.b16 %v162
    %v842 = vunpack.c.l.b16 %v163
    %v843 = vunpack.c.h.b16 %v163
    %v844 = vunpack.c.l.b16 %v164
    %v845 = vunpack.c.h.b16 %v164
    %v846 = vunpack.c.l.b16 %v165
    %v847 = vunpack.c.h.b16 %v165
    %v848 = vunpack.c.l.b16 %v166
    %v849 = vunpack.c.h.b16 %v166
    %v850 = vunpack.c.l.b16 %v167
    %v851 = vunpack.c.h.b16 %v167
    %v852 = vunpack.c.l.b16 %v168
    %v853 = vunpack.c.h.b16 %v168
    %v854 = vunpack.c.l.b16 %v169
    %v855 = vunpack.c.h.b16 %v169
    %v856 = vunpack.c.l.b16 %v170
    %v857 = vunpack.c.h.b16 %v170
    %v858 = vunpack.c.l.b16 %v171
    %v859 = vunpack.c.h.b16 %v171
    %v860 = vunpack.c.l.b16 %v172
    %v861 = vunpack.c.h.b16 %v172
    %v862 = vunpack.c.l.b16 %v173
    %v863 = vunpack.c.h.b16 %v173
    %v864 = vunpack.c.l.b16 %v174
    %v865 = vunpack.c.h.b16 %v174
    %v866 = vunpack.c.l.b16 %v175
    %v867 = vunpack.c.h.b16 %v175
    %v868 = vunpack.c.l.b16 %v176
    %v869 = vunpack.c.h.b16 %v176
    %v870 = vunpack.c.l.b16 %v177
    %v871 = vunpack.c.h.b16 %v177
    %v872 = vunpack.c.l.b16 %v178
    %v873 = vunpack.c.h.b16 %v178
    %v874 = vunpack.c.l.b16 %v179
    %v875 = vunpack.c.h.b16 %v179
    %v876 = vunpack.c.l.b16 %v180
    %v877 = vunpack.c.h.b16 %v180
    %v878 = vunpack.c.l.b16 %v181
    %v879 = vunpack.c.h.b16 %v181
    %v880 = vunpack.c.l.b16 %v182
    %v881 = vunpack.c.h.b16 %v182
    %v882 = vunpack.c.l.b16 %v183
    %v883 = vunpack.c.h.b16 %v183
    %v884 = vunpack.c.l.b16 %v184
    %v885 = vunpack.c.h.b16 %v184
    %v886 = vunpack.c.l.b16 %v185
    %v887 = vunpack.c.h.b16 %v185
    %v888 = vunpack.c.l.b16 %v186
    %v889 = vunpack.c.h.b16 %v186
    %v890 = vunpack.c.l.b16 %v187
    %v891 = vunpack.c.h.b16 %v187
    %v892 = vunpack.c.l.b16 %v188
    %v893 = vunpack.c.h.b16 %v188
    %v894 = vunpack.c.l.b16 %v189
    %v895 = vunpack.c.h.b16 %v189
    %v896 = vunpack.c.l.b16 %v190
    %v897 = vunpack.c.h.b16 %v190
    %v898 = vunpack.c.l.b16 %v191
    %v899 = vunpack.c.h.b16 %v191
    %v900 = vunpack.c.l.b16 %v192
    %v901 = vunpack.c.h.b16 %v192
    %v902 = vunpack.c.l.b16 %v193
    %v903 = vunpack.c.h.b16 %v193
    %v904 = vunpack.c.l.b16 %v194
    %v905 = vunpack.c.h.b16 %v194
    %v906 = vunpack.c.l.b16 %v195
    %v907 = vunpack.c.h.b16 %v195
    %v908 = vunpack.c.l.b16 %v196
    %v909 = vunpack.c.h.b16 %v196
    %v910 = vunpack.c.l.b16 %v197
    %v911 = vunpack.c.h.b16 %v197
    %v912 = vunpack.c.l.b16 %v198
    %v913 = vunpack.c.h.b16 %v198
    %v914 = vunpack.c.l.b16 %v199
    %v915 = vunpack.c.h.b16 %v199
    %v916 = vunpack.c.l.b16 %v200
    %v917 = vunpack.c.h.b16 %v200
    %v918 = vunpack.c.l.b16 %v201
    %v919 = vunpack.c.h.b16 %v201
    %v920 = vunpack.c.l.b16 %v202
    %v921 = vunpack.c.h.b16 %v202
    %v922 = vunpack.c.l.b16 %v203
    %v923 = vunpack.c.h.b16 %v203
    %v924 = vunpack.c.l.b16 %v204
    %v925 = vunpack.c.h.b16 %v204
    %v926 = vunpack.c.l.b16 %v205
    %v927 = vunpack.c.h.b16 %v205
    %v928 = vunpack.c.l.b16 %v206
    %v929 = vunpack.c.h.b16 %v206
    %v930 = vunpack.c.l.b16 %v207
    %v931 = vunpack.c.h.b16 %v207
    %v932 = vunpack.c.l.b16 %v208
    %v933 = vunpack.c.h.b16 %v208
    %v934 = vunpack.c.l.b16 %v209
    %v935 = vunpack.c.h.b16 %v209
    %v936 = vunpack.c.l.b16 %v210
    %v937 = vunpack.c.h.b16 %v210
    %v938 = vunpack.c.l.b16 %v211
    %v939 = vunpack.c.h.b16 %v211
    %v940 = vunpack.c.l.b16 %v212
    %v941 = vunpack.c.h.b16 %v212
    %v942 = vunpack.c.l.b16 %v213
    %v943 = vunpack.c.h.b16 %v213
    %v944 = vunpack.c.l.b16 %v214
    %v945 = vunpack.c.h.b16 %v214
    %v946 = vunpack.c.l.b16 %v215
    %v947 = vunpack.c.h.b16 %v215
    %v948 = vunpack.c.l.b16 %v216
    %v949 = vunpack.c.h.b16 %v216
    %v950 = vunpack.c.l.b16 %v217
    %v951 = vunpack.c.h.b16 %v217
    %v952 = vunpack.c.l.b16 %v218
    %v953 = vunpack.c.h.b16 %v218
    %v954 = vunpack.c.l.b16 %v219
    %v955 = vunpack.c.h.b16 %v219
    %v956 = vunpack.c.l.b16 %v220
    %v957 = vunpack.c.h.b16 %v220
    %v958 = vunpack.c.l.b16 %v221
    %v959 = vunpack.c.h.b16 %v221
    %v960 = vunpack.c.l.b16 %v222
    %v961 = vunpack.c.h.b16 %v222
    %v962 = vunpack.c.l.b16 %v223
    %v963 = vunpack.c.h.b16 %v223
    %v964 = vunpack.c.l.b16 %v224
    %v965 = vunpack.c.h.b16 %v224
    %v966 = vunpack.c.l.b16 %v225
    %v967 = vunpack.c.h.b16 %v225
    %v968 = vunpack.c.l.b16 %v226
    %v969 = vunpack.c.h.b16 %v226
    %v970 = vunpack.c.l.b16 %v227
    %v971 = vunpack.c.h.b16 %v227
    %v972 = vunpack.c.l.b16 %v228
    %v973 = vunpack.c.h.b16 %v228
    %v974 = vunpack.c.l.b16 %v229
    %v975 = vunpack.c.h.b16 %v229
    %v976 = vunpack.c.l.b16 %v230
    %v977 = vunpack.c.h.b16 %v230
    %v978 = vunpack.c.l.b16 %v231
    %v979 = vunpack.c.h.b16 %v231
    %v980 = vunpack.c.l.b16 %v232
    %v981 = vunpack.c.h.b16 %v232
    %v982 = vunpack.c.l.b16 %v233
    %v983 = vunpack.c.h.b16 %v233
    %v984 = vunpack.c.l.b16 %v234
    %v985 = vunpack.c.h.b16 %v234
    %v986 = vunpack.c.l.b16 %v235
    %v987 = vunpack.c.h.b16 %v235
    %v988 = vunpack.c.l.b16 %v236
    %v989 = vunpack.c.h.b16 %v236
    %v990 = vunpack.c.l.b16 %v237
    %v991 = vunpack.c.h.b16 %v237
    %v992 = vunpack.c.l.b16 %v238
    %v993 = vunpack.c.h.b16 %v238
    %v994 = vunpack.c.l.b16 %v239
    %v995 = vunpack.c.h.b16 %v239
    %v996 = vunpack.c.l.b16 %v240
    %v997 = vunpack.c.h.b16 %v240
    %v998 = vunpack.c.l.b16 %v241
    %v999 = vunpack.c.h.b16 %v241
    %v1000 = vunpack.c.l.b16 %v242
    %v1001 = vunpack.c.h.b16 %v242
    %v1002 = vunpack.c.l.b16 %v243
    %v1003 = vunpack.c.h.b16 %v243
    %v1004 = vunpack.c.l.b16 %v244
    %v1005 = vunpack.c.h.b16 %v244
    %v1006 = vunpack.c.l.b16 %v245
    %v1007 = vunpack.c.h.b16 %v245
    %v1008 = vunpack.c.l.b16 %v246
    %v1009 = vunpack.c.h.b16 %v246
    %v1010 = vunpack.c.l.b16 %v247
    %v1011 = vunpack.c.h.b16 %v247
    %v1012 = vunpack.c.l.b16 %v248
    %v1013 = vunpack.c.h.b16 %v248
    %v1014 = vunpack.c.l.b16 %v249
    %v1015 = vunpack.c.h.b16 %v249
    %v1016 = vunpack.c.l.b16 %v250
    %v1017 = vunpack.c.h.b16 %v250
    %v1018 = vunpack.c.l.b16 %v251
    %v1019 = vunpack.c.h.b16 %v251
    %v1020 = vunpack.c.l.b16 %v252
    %v1021 = vunpack.c.h.b16 %v252
    %v1022 = vunpack.c.l.b16 %v253
    %v1023 = vunpack.c.h.b16 %v253
    %v1024 = vunpack.c.l.b16 %v254
    %v1025 = vunpack.c.h.b16 %v254
    %v1026 = vunpack.c.l.b16 %v255
    %v1027 = vunpack.c.h.b16 %v255
    %v1028 = vunpack.c.l.b16 %v256
    %v1029 = vunpack.c.h.b16 %v256
    %v1030 = vunpack.c.l.b16 %v257
    %v1031 = vunpack.c.h.b16 %v257
    %v1032 = vunpack.c.l.b16 %v258
    %v1033 = vunpack.c.h.b16 %v258
    %v1034 = vunpack.c.l.b16 %v259
    %v1035 = vunpack.c.h.b16 %v259
    %v1036 = vunpack.c.l.b16 %v260
    %v1037 = vunpack.c.h.b16 %v260
    %v1038 = vunpack.c.l.b16 %v261
    %v1039 = vunpack.c.h.b16 %v261
    %v1040 = vunpack.c.l.b16 %v262
    %v1041 = vunpack.c.h.b16 %v262
    %v1042 = vunpack.c.l.b16 %v263
    %v1043 = vunpack.c.h.b16 %v263
    %v1044 = vunpack.c.l.b16 %v264
    %v1045 = vunpack.c.h.b16 %v264
    %v1046 = vunpack.c.l.b16 %v265
    %v1047 = vunpack.c.h.b16 %v265
    %v1048 = vunpack.c.l.b16 %v266
    %v1049 = vunpack.c.h.b16 %v266
    %v1050 = vunpack.c.l.b16 %v267
    %v1051 = vunpack.c.h.b16 %v267
    %v1052 = vunpack.c.l.b16 %v268
    %v1053 = vunpack.c.h.b16 %v268
    %v1054 = vunpack.c.l.b16 %v269
    %v1055 = vunpack.c.h.b16 %v269
    %v1056 = vunpack.c.l.b16 %v270
    %v1057 = vunpack.c.h.b16 %v270
    %v1058 = vunpack.c.l.b16 %v271
    %v1059 = vunpack.c.h.b16 %v271
    %v1060 = vunpack.c.l.b16 %v272
    %v1061 = vunpack.c.h.b16 %v272
    %v1062 = vunpack.c.l.b16 %v273
    %v1063 = vunpack.c.h.b16 %v273
    %v1064 = vunpack.c.l.b16 %v274
    %v1065 = vunpack.c.h.b16 %v274
    %v1066 = vunpack.c.l.b16 %v275
    %v1067 = vunpack.c.h.b16 %v275
    %v1068 = vunpack.c.l.b16 %v276
    %v1069 = vunpack.c.h.b16 %v276
    %v1070 = vunpack.c.l.b16 %v277
    %v1071 = vunpack.c.h.b16 %v277
    %v1072 = vunpack.c.l.b16 %v278
    %v1073 = vunpack.c.h.b16 %v278
    %v1074 = vunpack.c.l.b16 %v279
    %v1075 = vunpack.c.h.b16 %v279
    %v1076 = vunpack.c.l.b16 %v280
    %v1077 = vunpack.c.h.b16 %v280
    %v1078 = vunpack.c.l.b16 %v281
    %v1079 = vunpack.c.h.b16 %v281
    %v1080 = vunpack.c.l.b16 %v282
    %v1081 = vunpack.c.h.b16 %v282
    %v1082 = vunpack.c.l.b16 %v283
    %v1083 = vunpack.c.h.b16 %v283
    %v1084 = vunpack.c.l.b16 %v284
    %v1085 = vunpack.c.h.b16 %v284
    %v1086 = vunpack.c.l.b16 %v285
    %v1087 = vunpack.c.h.b16 %v285
    %v1088 = vunpack.c.l.b16 %v286
    %v1089 = vunpack.c.h.b16 %v286
    %v1090 = vunpack.c.l.b16 %v287
    %v1091 = vunpack.c.h.b16 %v287
    %v1092 = vunpack.c.l.b16 %v288
    %v1093 = vunpack.c.h.b16 %v288
    %v1094 = vunpack.c.l.b16 %v289
    %v1095 = vunpack.c.h.b16 %v289
    %v1096 = vunpack.c.l.b16 %v290
    %v1097 = vunpack.c.h.b16 %v290
    %v1098 = vunpack.c.l.b16 %v291
    %v1099 = vunpack.c.h.b16 %v291
    %v1100 = vunpack.c.l.b16 %v292
    %v1101 = vunpack.c.h.b16 %v292
    %v1102 = vunpack.c.l.b16 %v293
    %v1103 = vunpack.c.h.b16 %v293
    %v1104 = vunpack.c.l.b16 %v294
    %v1105 = vunpack.c.h.b16 %v294
    %v1106 = vunpack.c.l.b16 %v295
    %v1107 = vunpack.c.h.b16 %v295
    %v1108 = vunpack.c.l.b16 %v296
    %v1109 = vunpack.c.h.b16 %v296
    %v1110 = vunpack.c.l.b16 %v297
    %v1111 = vunpack.c.h.b16 %v297
    %v1112 = vunpack.c.l.b16 %v298
    %v1113 = vunpack.c.h.b16 %v298
    %v1114 = vunpack.c.l.b16 %v299
    %v1115 = vunpack.c.h.b16 %v299
    %v1116 = vunpack.c.l.b16 %v300
    %v1117 = vunpack.c.h.b16 %v300
    %v1118 = vunpack.c.l.b16 %v301
    %v1119 = vunpack.c.h.b16 %v301
    %v1120 = vunpack.c.l.b16 %v302
    %v1121 = vunpack.c.h.b16 %v302
    %v1122 = vunpack.c.l.b16 %v303
    %v1123 = vunpack.c.h.b16 %v303
    %v1124 = vunpack.c.l.b16 %v304
    %v1125 = vunpack.c.h.b16 %v304
    %v1126 = vunpack.c.l.b16 %v305
    %v1127 = vunpack.c.h.b16 %v305
    %v1128 = vunpack.c.l.b16 %v306
    %v1129 = vunpack.c.h.b16 %v306
    %v1130 = vunpack.c.l.b16 %v307
    %v1131 = vunpack.c.h.b16 %v307
    %v1132 = vunpack.c.l.b16 %v308
    %v1133 = vunpack.c.h.b16 %v308
    %v1134 = vunpack.c.l.b16 %v309
    %v1135 = vunpack.c.h.b16 %v309
    %v1136 = vunpack.c.l.b16 %v310
    %v1137 = vunpack.c.h.b16 %v310
    %v1138 = vunpack.c.l.b16 %v311
    %v1139 = vunpack.c.h.b16 %v311
    %v1140 = vunpack.c.l.b16 %v312
    %v1141 = vunpack.c.h.b16 %v312
    %v1142 = vunpack.c.l.b16 %v313
    %v1143 = vunpack.c.h.b16 %v313
    %v1144 = vunpack.c.l.b16 %v314
    %v1145 = vunpack.c.h.b16 %v314
    %v1146 = vunpack.c.l.b16 %v315
    %v1147 = vunpack.c.h.b16 %v315
    %v1148 = vunpack.c.l.b16 %v316
    %v1149 = vunpack.c.h.b16 %v316
    %v1150 = vunpack.c.l.b16 %v317
    %v1151 = vunpack.c.h.b16 %v317
    %v1152 = vunpack.c.l.b16 %v318
    %v1153 = vunpack.c.h.b16 %v318
    %v1154 = vunpack.c.l.b16 %v319
    %v1155 = vunpack.c.h.b16 %v319
    %v1156 = vunpack.c.l.b16 %v320
    %v1157 = vunpack.c.h.b16 %v320
    %v1158 = vunpack.c.l.b16 %v321
    %v1159 = vunpack.c.h.b16 %v321
    %v1160 = vunpack.c.l.b16 %v322
    %v1161 = vunpack.c.h.b16 %v322
    %v1162 = vunpack.c.l.b16 %v323
    %v1163 = vunpack.c.h.b16 %v323
    %v1164 = vunpack.c.l.b16 %v324
    %v1165 = vunpack.c.h.b16 %v324
    %v1166 = vunpack.c.l.b16 %v325
    %v1167 = vunpack.c.h.b16 %v325
    %v1168 = vunpack.c.l.b16 %v326
    %v1169 = vunpack.c.h.b16 %v326
    %v1170 = vunpack.c.l.b16 %v327
    %v1171 = vunpack.c.h.b16 %v327
    %v1172 = vunpack.c.l.b16 %v328
    %v1173 = vunpack.c.h.b16 %v328
    %v1174 = vunpack.c.l.b16 %v329
    %v1175 = vunpack.c.h.b16 %v329
    %v1176 = vunpack.c.l.b16 %v330
    %v1177 = vunpack.c.h.b16 %v330
    %v1178 = vunpack.c.l.b16 %v331
    %v1179 = vunpack.c.h.b16 %v331
    %v1180 = vpack.c.b16 %v672, %v668
    %v1181 = vpack.c.b16 %v673, %v669
    %v1182 = vpack.c.b16 %v674, %v670
    %v1183 = vpack.c.b16 %v675, %v671
    %v1184 = vpack.c.b16 %v680, %v676
    %v1185 = vpack.c.b16 %v681, %v677
    %v1186 = vpack.c.b16 %v682, %v678
    %v1187 = vpack.c.b16 %v683, %v679
    %v1188 = vpack.c.b16 %v688, %v684
    %v1189 = vpack.c.b16 %v689, %v685
    %v1190 = vpack.c.b16 %v690, %v686
    %v1191 = vpack.c.b16 %v691, %v687
    %v1192 = vpack.c.b16 %v696, %v692
    %v1193 = vpack.c.b16 %v697, %v693
    %v1194 = vpack.c.b16 %v698, %v694
    %v1195 = vpack.c.b16 %v699, %v695
    %v1196 = vpack.c.b16 %v704, %v700
    %v1197 = vpack.c.b16 %v705, %v701
    %v1198 = vpack.c.b16 %v706, %v702
    %v1199 = vpack.c.b16 %v707, %v703
    %v1200 = vpack.c.b16 %v712, %v708
    %v1201 = vpack.c.b16 %v713, %v709
    %v1202 = vpack.c.b16 %v714, %v710
    %v1203 = vpack.c.b16 %v715, %v711
    %v1204 = vpack.c.b16 %v720, %v716
    %v1205 = vpack.c.b16 %v721, %v717
    %v1206 = vpack.c.b16 %v722, %v718
    %v1207 = vpack.c.b16 %v723, %v719
    %v1208 = vpack.c.b16 %v728, %v724
    %v1209 = vpack.c.b16 %v729, %v725
    %v1210 = vpack.c.b16 %v730, %v726
    %v1211 = vpack.c.b16 %v731, %v727
    %v1212 = vpack.c.b16 %v736, %v732
    %v1213 = vpack.c.b16 %v737, %v733
    %v1214 = vpack.c.b16 %v738, %v734
    %v1215 = vpack.c.b16 %v739, %v735
    %v1216 = vpack.c.b16 %v744, %v740
    %v1217 = vpack.c.b16 %v745, %v741
    %v1218 = vpack.c.b16 %v746, %v742
    %v1219 = vpack.c.b16 %v747, %v743
    %v1220 = vpack.c.b16 %v752, %v748
    %v1221 = vpack.c.b16 %v753, %v749
    %v1222 = vpack.c.b16 %v754, %v750
    %v1223 = vpack.c.b16 %v755, %v751
    %v1224 = vpack.c.b16 %v760, %v756
    %v1225 = vpack.c.b16 %v761, %v757
    %v1226 = vpack.c.b16 %v762, %v758
    %v1227 = vpack.c.b16 %v763, %v759
    %v1228 = vpack.c.b16 %v768, %v764
    %v1229 = vpack.c.b16 %v769, %v765
    %v1230 = vpack.c.b16 %v770, %v766
    %v1231 = vpack.c.b16 %v771, %v767
    %v1232 = vpack.c.b16 %v776, %v772
    %v1233 = vpack.c.b16 %v777, %v773
    %v1234 = vpack.c.b16 %v778, %v774
    %v1235 = vpack.c.b16 %v779, %v775
    %v1236 = vpack.c.b16 %v784, %v780
    %v1237 = vpack.c.b16 %v785, %v781
    %v1238 = vpack.c.b16 %v786, %v782
    %v1239 = vpack.c.b16 %v787, %v783
    %v1240 = vpack.c.b16 %v792, %v788
    %v1241 = vpack.c.b16 %v793, %v789
    %v1242 = vpack.c.b16 %v794, %v790
    %v1243 = vpack.c.b16 %v795, %v791
    %v1244 = vpack.c.b16 %v800, %v796
    %v1245 = vpack.c.b16 %v801, %v797
    %v1246 = vpack.c.b16 %v802, %v798
    %v1247 = vpack.c.b16 %v803, %v799
    %v1248 = vpack.c.b16 %v808, %v804
    %v1249 = vpack.c.b16 %v809, %v805
    %v1250 = vpack.c.b16 %v810, %v806
    %v1251 = vpack.c.b16 %v811, %v807
    %v1252 = vpack.c.b16 %v816, %v812
    %v1253 = vpack.c.b16 %v817, %v813
    %v1254 = vpack.c.b16 %v818, %v814
    %v1255 = vpack.c.b16 %v819, %v815
    %v1256 = vpack.c.b16 %v824, %v820
    %v1257 = vpack.c.b16 %v825, %v821
    %v1258 = vpack.c.b16 %v826, %v822
    %v1259 = vpack.c.b16 %v827, %v823
    %v1260 = vpack.c.b16 %v832, %v828
    %v1261 = vpack.c.b16 %v833, %v829
    %v1262 = vpack.c.b16 %v834, %v830
    %v1263 = vpack.c.b16 %v835, %v831
    %v1264 = vpack.c.b16 %v840, %v836
    %v1265 = vpack.c.b16 %v841, %v837
    %v1266 = vpack.c.b16 %v842, %v838
    %v1267 = vpack.c.b16 %v843, %v839
    %v1268 = vpack.c.b16 %v848, %v844
    %v1269 = vpack.c.b16 %v849, %v845
    %v1270 = vpack.c.b16 %v850, %v846
    %v1271 = vpack.c.b16 %v851, %v847
    %v1272 = vpack.c.b16 %v856, %v852
    %v1273 = vpack.c.b16 %v857, %v853
    %v1274 = vpack.c.b16 %v858, %v854
    %v1275 = vpack.c.b16 %v859, %v855
    %v1276 = vpack.c.b16 %v864, %v860
    %v1277 = vpack.c.b16 %v865, %v861
    %v1278 = vpack.c.b16 %v866, %v862
    %v1279 = vpack.c.b16 %v867, %v863
    %v1280 = vpack.c.b16 %v872, %v868
    %v1281 = vpack.c.b16 %v873, %v869
    %v1282 = vpack.c.b16 %v874, %v870
    %v1283 = vpack.c.b16 %v875, %v871
    %v1284 = vpack.c.b16 %v880, %v876
    %v1285 = vpack.c.b16 %v881, %v877
    %v1286 = vpack.c.b16 %v882, %v878
    %v1287 = vpack.c.b16 %v883, %v879
    %v1288 = vpack.c.b16 %v888, %v884
    %v1289 = vpack.c.b16 %v889, %v885
    %v1290 = vpack.c.b16 %v890, %v886
    %v1291 = vpack.c.b16 %v891, %v887
    %v1292 = vpack.c.b16 %v896, %v892
    %v1293 = vpack.c.b16 %v897, %v893
    %v1294 = vpack.c.b16 %v898, %v894
    %v1295 = vpack.c.b16 %v899, %v895
    %v1296 = vpack.c.b16 %v904, %v900
    %v1297 = vpack.c.b16 %v905, %v901
    %v1298 = vpack.c.b16 %v906, %v902
    %v1299 = vpack.c.b16 %v907, %v903
    %v1300 = vpack.c.b16 %v912, %v908
    %v1301 = vpack.c.b16 %v913, %v909
    %v1302 = vpack.c.b16 %v914, %v910
    %v1303 = vpack.c.b16 %v915, %v911
    %v1304 = vpack.c.b16 %v920, %v916
    %v1305 = vpack.c.b16 %v921, %v917
    %v1306 = vpack.c.b16 %v922, %v918
    %v1307 = vpack.c.b16 %v923, %v919
    %v1308 = vpack.c.b16 %v928, %v924
    %v1309 = vpack.c.b16 %v929, %v925
    %v1310 = vpack.c.b16 %v930, %v926
    %v1311 = vpack.c.b16 %v931, %v927
    %v1312 = vpack.c.b16 %v936, %v932
    %v1313 = vpack.c.b16 %v937, %v933
    %v1314 = vpack.c.b16 %v938, %v934
    %v1315 = vpack.c.b16 %v939, %v935
    %v1316 = vpack.c.b16 %v944, %v940
    %v1317 = vpack.c.b16 %v945, %v941
    %v1318 = vpack.c.b16 %v946, %v942
    %v1319 = vpack.c.b16 %v947, %v943
    %v1320 = vpack.c.b16 %v952, %v948
    %v1321 = vpack.c.b16 %v953, %v949
    %v1322 = vpack.c.b16 %v954, %v950
    %v1323 = vpack.c.b16 %v955, %v951
    %v1324 = vpack.c.b16 %v960, %v956
    %v1325 = vpack.c.b16 %v961, %v957
    %v1326 = vpack.c.b16 %v962, %v958
    %v1327 = vpack.c.b16 %v963, %v959
    %v1328 = vpack.c.b16 %v968, %v964
    %v1329 = vpack.c.b16 %v969, %v965
    %v1330 = vpack.c.b16 %v970, %v966
    %v1331 = vpack.c.b16 %v971, %v967
    %v1332 = vpack.c.b16 %v976, %v972
    %v1333 = vpack.c.b16 %v977, %v973
    %v1334 = vpack.c.b16 %v978, %v974
    %v1335 = vpack.c.b16 %v979, %v975
    %v1336 = vpack.c.b16 %v984, %v980
    %v1337 = vpack.c.b16 %v985, %v981
    %v1338 = vpack.c.b16 %v986, %v982
    %v1339 = vpack.c.b16 %v987, %v983
    %v1340 = vpack.c.b16 %v992, %v988
    %v1341 = vpack.c.b16 %v993, %v989
    %v1342 = vpack.c.b16 %v994, %v990
    %v1343 = vpack.c.b16 %v995, %v991
    %v1344 = vpack.c.b16 %v1000, %v996
    %v1345 = vpack.c.b16 %v1001, %v997
    %v1346 = vpack.c.b16 %v1002, %v998
    %v1347 = vpack.c.b16 %v1003, %v999
    %v1348 = vpack.c.b16 %v1008, %v1004
    %v1349 = vpack.c.b16 %v1009, %v1005
    %v1350 = vpack.c.b16 %v1010, %v1006
    %v1351 = vpack.c.b16 %v1011, %v1007
    %v1352 = vpack.c.b16 %v1016, %v1012
    %v1353 = vpack.c.b16 %v1017, %v1013
    %v1354 = vpack.c.b16 %v1018, %v1014
    %v1355 = vpack.c.b16 %v1019, %v1015
    %v1356 = vpack.c.b16 %v1024, %v1020
    %v1357 = vpack.c.b16 %v1025, %v1021
    %v1358 = vpack.c.b16 %v1026, %v1022
    %v1359 = vpack.c.b16 %v1027, %v1023
    %v1360 = vpack.c.b16 %v1032, %v1028
    %v1361 = vpack.c.b16 %v1033, %v1029
    %v1362 = vpack.c.b16 %v1034, %v1030
    %v1363 = vpack.c.b16 %v1035, %v1031
    %v1364 = vpack.c.b16 %v1040, %v1036
    %v1365 = vpack.c.b16 %v1041, %v1037
    %v1366 = vpack.c.b16 %v1042, %v1038
    %v1367 = vpack.c.b16 %v1043, %v1039
    %v1368 = vpack.c.b16 %v1048, %v1044
    %v1369 = vpack.c.b16 %v1049, %v1045
    %v1370 = vpack.c.b16 %v1050, %v1046
    %v1371 = vpack.c.b16 %v1051, %v1047
    %v1372 = vpack.c.b16 %v1056, %v1052
    %v1373 = vpack.c.b16 %v1057, %v1053
    %v1374 = vpack.c.b16 %v1058, %v1054
    %v1375 = vpack.c.b16 %v1059, %v1055
    %v1376 = vpack.c.b16 %v1064, %v1060
    %v1377 = vpack.c.b16 %v1065, %v1061
    %v1378 = vpack.c.b16 %v1066, %v1062
    %v1379 = vpack.c.b16 %v1067, %v1063
    %v1380 = vpack.c.b16 %v1072, %v1068
    %v1381 = vpack.c.b16 %v1073, %v1069
    %v1382 = vpack.c.b16 %v1074, %v1070
    %v1383 = vpack.c.b16 %v1075, %v1071
    %v1384 = vpack.c.b16 %v1080, %v1076
    %v1385 = vpack.c.b16 %v1081, %v1077
    %v1386 = vpack.c.b16 %v1082, %v1078
    %v1387 = vpack.c.b16 %v1083, %v1079
    %v1388 = vpack.c.b16 %v1088, %v1084
    %v1389 = vpack.c.b16 %v1089, %v1085
    %v1390 = vpack.c.b16 %v1090, %v1086
    %v1391 = vpack.c.b16 %v1091, %v1087
    %v1392 = vpack.c.b16 %v1096, %v1092
    %v1393 = vpack.c.b16 %v1097, %v1093
    %v1394 = vpack.c.b16 %v1098, %v1094
    %v1395 = vpack.c.b16 %v1099, %v1095
    %v1396 = vpack.c.b16 %v1104, %v1100
    %v1397 = vpack.c.b16 %v1105, %v1101
    %v1398 = vpack.c.b16 %v1106, %v1102
    %v1399 = vpack.c.b16 %v1107, %v1103
    %v1400 = vpack.c.b16 %v1112, %v1108
    %v1401 = vpack.c.b16 %v1113, %v1109
    %v1402 = vpack.c.b16 %v1114, %v1110
    %v1403 = vpack.c.b16 %v1115, %v1111
    %v1404 = vpack.c.b16 %v1120, %v1116
    %v1405 = vpack.c.b16 %v1121, %v1117
    %v1406 = vpack.c.b16 %v1122, %v1118
    %v1407 = vpack.c.b16 %v1123, %v1119
    %v1408 = vpack.c.b16 %v1128, %v1124
    %v1409 = vpack.c.b16 %v1129, %v1125
    %v1410 = vpack.c.b16 %v1130, %v1126
    %v1411 = vpack.c.b16 %v1131, %v1127
    %v1412 = vpack.c.b16 %v1136, %v1132
    %v1413 = vpack.c.b16 %v1137, %v1133
    %v1414 = vpack.c.b16 %v1138, %v1134
    %v1415 = vpack.c.b16 %v1139, %v1135
    %v1416 = vpack.c.b16 %v1144, %v1140
    %v1417 = vpack.c.b16 %v1145, %v1141
    %v1418 = vpack.c.b16 %v1146, %v1142
    %v1419 = vpack.c.b16 %v1147, %v1143
    %v1420 = vpack.c.b16 %v1152, %v1148
    %v1421 = vpack.c.b16 %v1153, %v1149
    %v1422 = vpack.c.b16 %v1154, %v1150
    %v1423 = vpack.c.b16 %v1155, %v1151
    %v1424 = vpack.c.b16 %v1160, %v1156
    %v1425 = vpack.c.b16 %v1161, %v1157
    %v1426 = vpack.c.b16 %v1162, %v1158
    %v1427 = vpack.c.b16 %v1163, %v1159
    %v1428 = vpack.c.b16 %v1168, %v1164
    %v1429 = vpack.c.b16 %v1169, %v1165
    %v1430 = vpack.c.b16 %v1170, %v1166
    %v1431 = vpack.c.b16 %v1171, %v1167
    %v1432 = vpack.c.b16 %v1176, %v1172
    %v1433 = vpack.c.b16 %v1177, %v1173
    %v1434 = vpack.c.b16 %v1178, %v1174
    %v1435 = vpack.c.b16 %v1179, %v1175
    %1692 = vmatprep.subr.bf16.mxu0 %v1181
    %1693 = vmatpush1.bf16.msra.mxu0 %v1180
    %1694 = vmatprep.subr.bf16.mxu0 %v1185
    %1695 = vmatpush1.bf16.msra.mxu0 %v1184
    %1696 = vmatprep.subr.bf16.mxu0 %v1189
    %1697 = vmatpush1.bf16.msra.mxu0 %v1188
    %1698 = vmatprep.subr.bf16.mxu0 %v1193
    %1699 = vmatpush1.bf16.msra.mxu0 %v1192
    %1700 = vmatprep.subr.bf16.mxu0 %v1197
    %1701 = vmatpush1.bf16.msra.mxu0 %v1196
    %1702 = vmatprep.subr.bf16.mxu0 %v1201
    %1703 = vmatpush1.bf16.msra.mxu0 %v1200
    %1704 = vmatprep.subr.bf16.mxu0 %v1205
    %1705 = vmatpush1.bf16.msra.mxu0 %v1204
    %1706 = vmatprep.subr.bf16.mxu0 %v1209
    %1707 = vmatpush1.bf16.msra.mxu0 %v1208
    %1708 = vmatprep.subr.bf16.mxu0 %v1213
    %1709 = vmatpush1.bf16.msra.mxu0 %v1212
    %1710 = vmatprep.subr.bf16.mxu0 %v1217
    %1711 = vmatpush1.bf16.msra.mxu0 %v1216
    %1712 = vmatprep.subr.bf16.mxu0 %v1221
    %1713 = vmatpush1.bf16.msra.mxu0 %v1220
    %1714 = vmatprep.subr.bf16.mxu0 %v1225
    %1715 = vmatpush1.bf16.msra.mxu0 %v1224
    %1716 = vmatprep.subr.bf16.mxu0 %v1229
    %1717 = vmatpush1.bf16.msra.mxu0 %v1228
    %1718 = vmatprep.subr.bf16.mxu0 %v1233
    %1719 = vmatpush1.bf16.msra.mxu0 %v1232
    %1720 = vmatprep.subr.bf16.mxu0 %v1237
    %1721 = vmatpush1.bf16.msra.mxu0 %v1236
    %1722 = vmatprep.subr.bf16.mxu0 %v1241
    %1723 = vmatpush1.bf16.msra.mxu0 %v1240
    %1724 = vmatprep.mubr.bf16.mxu0 %v392
    %1725 = vmatmul.mubr.bf16.gmra.mrb[0].mxu0 %v378
    %v1726 = vpop.f32.mrb[0].mxu0
    %v1727 = vadd.f32 %v337, %v1726
    %v1728 = vpop.f32.mrb[0].mxu0
    %v1729 = vadd.f32 %v341, %v1728
    %v1730 = vpop.f32.mrb[0].mxu0
    %v1731 = vpop.f32.mrb[0].mxu0
    %1732 = vdwg.mxu0
    %1733 = vmatprep.subr.bf16.mxu0 %v1245
    %1734 = vmatpush1.bf16.msra.mxu0 %v1244
    %1735 = vmatprep.subr.bf16.mxu0 %v1249
    %1736 = vmatpush1.bf16.msra.mxu0 %v1248
    %1737 = vmatprep.subr.bf16.mxu0 %v1253
    %1738 = vmatpush1.bf16.msra.mxu0 %v1252
    %1739 = vmatprep.subr.bf16.mxu0 %v1257
    %1740 = vmatpush1.bf16.msra.mxu0 %v1256
    %1741 = vmatprep.subr.bf16.mxu0 %v1261
    %1742 = vmatpush1.bf16.msra.mxu0 %v1260
    %1743 = vmatprep.subr.bf16.mxu0 %v1265
    %1744 = vmatpush1.bf16.msra.mxu0 %v1264
    %1745 = vmatprep.subr.bf16.mxu0 %v1269
    %1746 = vmatpush1.bf16.msra.mxu0 %v1268
    %1747 = vmatprep.subr.bf16.mxu0 %v1273
    %1748 = vmatpush1.bf16.msra.mxu0 %v1272
    %1749 = vmatprep.subr.bf16.mxu0 %v1277
    %1750 = vmatpush1.bf16.msra.mxu0 %v1276
    %1751 = vmatprep.subr.bf16.mxu0 %v1281
    %1752 = vmatpush1.bf16.msra.mxu0 %v1280
    %1753 = vmatprep.subr.bf16.mxu0 %v1285
    %1754 = vmatpush1.bf16.msra.mxu0 %v1284
    %1755 = vmatprep.subr.bf16.mxu0 %v1289
    %1756 = vmatpush1.bf16.msra.mxu0 %v1288
    %1757 = vmatprep.subr.bf16.mxu0 %v1293
    %1758 = vmatpush1.bf16.msra.mxu0 %v1292
    %1759 = vmatprep.subr.bf16.mxu0 %v1297
    %1760 = vmatpush1.bf16.msra.mxu0 %v1296
    %1761 = vmatprep.subr.bf16.mxu0 %v1301
    %1762 = vmatpush1.bf16.msra.mxu0 %v1300
    %1763 = vmatprep.subr.bf16.mxu0 %v1305
    %1764 = vmatpush1.bf16.msra.mxu0 %v1304
    %1765 = vmatprep.mubr.bf16.mxu0 %v402
    %1766 = vmatmul.mubr.bf16.gmra.mrb[0].mxu0 %v400
    %v1767 = vpop.f32.mrb[0].mxu0
    %v1768 = vadd.f32 %v1727, %v1767
    %v1769 = vpop.f32.mrb[0].mxu0
    %v1770 = vadd.f32 %v1729, %v1769
    %v1771 = vpop.f32.mrb[0].mxu0
    %v1772 = vpop.f32.mrb[0].mxu0
    %1773 = vdwg.mxu0
    %1774 = vmatprep.subr.bf16.mxu0 %v1309
    %1775 = vmatpush1.bf16.msra.mxu0 %v1308
    %1776 = vmatprep.subr.bf16.mxu0 %v1313
    %1777 = vmatpush1.bf16.msra.mxu0 %v1312
    %1778 = vmatprep.subr.bf16.mxu0 %v1317
    %1779 = vmatpush1.bf16.msra.mxu0 %v1316
    %1780 = vmatprep.subr.bf16.mxu0 %v1321
    %1781 = vmatpush1.bf16.msra.mxu0 %v1320
    %1782 = vmatprep.subr.bf16.mxu0 %v1325
    %1783 = vmatpush1.bf16.msra.mxu0 %v1324
    %1784 = vmatprep.subr.bf16.mxu0 %v1329
    %1785 = vmatpush1.bf16.msra.mxu0 %v1328
    %1786 = vmatprep.subr.bf16.mxu0 %v1333
    %1787 = vmatpush1.bf16.msra.mxu0 %v1332
    %1788 = vmatprep.subr.bf16.mxu0 %v1337
    %1789 = vmatpush1.bf16.msra.mxu0 %v1336
    %1790 = vmatprep.subr.bf16.mxu0 %v1341
    %1791 = vmatpush1.bf16.msra.mxu0 %v1340
    %1792 = vmatprep.subr.bf16.mxu0 %v1345
    %1793 = vmatpush1.bf16.msra.mxu0 %v1344
    %1794 = vmatprep.subr.bf16.mxu0 %v1349
    %1795 = vmatpush1.bf16.msra.mxu0 %v1348
    %1796 = vmatprep.subr.bf16.mxu0 %v1353
    %1797 = vmatpush1.bf16.msra.mxu0 %v1352
    %1798 = vmatprep.subr.bf16.mxu0 %v1357
    %1799 = vmatpush1.bf16.msra.mxu0 %v1356
    %1800 = vmatprep.subr.bf16.mxu0 %v1361
    %1801 = vmatpush1.bf16.msra.mxu0 %v1360
    %1802 = vmatprep.subr.bf16.mxu0 %v1365
    %1803 = vmatpush1.bf16.msra.mxu0 %v1364
    %1804 = vmatprep.subr.bf16.mxu0 %v1369
    %1805 = vmatpush1.bf16.msra.mxu0 %v1368
    %1806 = vmatprep.mubr.bf16.mxu0 %v399
    %1807 = vmatmul.mubr.bf16.gmra.mrb[0].mxu0 %v385
    %v1808 = vpop.f32.mrb[0].mxu0
    %v1809 = vadd.f32 %v1768, %v1808
    %v1810 = vpop.f32.mrb[0].mxu0
    %v1811 = vadd.f32 %v1770, %v1810
    %v1812 = vpop.f32.mrb[0].mxu0
    %v1813 = vpop.f32.mrb[0].mxu0
    %1814 = vdwg.mxu0
    %1815 = vmatprep.subr.bf16.mxu0 %v1373
    %1816 = vmatpush1.bf16.msra.mxu0 %v1372
    %1817 = vmatprep.subr.bf16.mxu0 %v1377
    %1818 = vmatpush1.bf16.msra.mxu0 %v1376
    %1819 = vmatprep.subr.bf16.mxu0 %v1381
    %1820 = vmatpush1.bf16.msra.mxu0 %v1380
    %1821 = vmatprep.subr.bf16.mxu0 %v1385
    %1822 = vmatpush1.bf16.msra.mxu0 %v1384
    %1823 = vmatprep.subr.bf16.mxu0 %v1389
    %1824 = vmatpush1.bf16.msra.mxu0 %v1388
    %1825 = vmatprep.subr.bf16.mxu0 %v1393
    %1826 = vmatpush1.bf16.msra.mxu0 %v1392
    %1827 = vmatprep.subr.bf16.mxu0 %v1397
    %1828 = vmatpush1.bf16.msra.mxu0 %v1396
    %1829 = vmatprep.subr.bf16.mxu0 %v1401
    %1830 = vmatpush1.bf16.msra.mxu0 %v1400
    %1831 = vmatprep.subr.bf16.mxu0 %v1405
    %1832 = vmatpush1.bf16.msra.mxu0 %v1404
    %1833 = vmatprep.subr.bf16.mxu0 %v1409
    %1834 = vmatpush1.bf16.msra.mxu0 %v1408
    %1835 = vmatprep.subr.bf16.mxu0 %v1413
    %1836 = vmatpush1.bf16.msra.mxu0 %v1412
    %1837 = vmatprep.subr.bf16.mxu0 %v1417
    %1838 = vmatpush1.bf16.msra.mxu0 %v1416
    %1839 = vmatprep.subr.bf16.mxu0 %v1421
    %1840 = vmatpush1.bf16.msra.mxu0 %v1420
    %1841 = vmatprep.subr.bf16.mxu0 %v1425
    %1842 = vmatpush1.bf16.msra.mxu0 %v1424
    %1843 = vmatprep.subr.bf16.mxu0 %v1429
    %1844 = vmatpush1.bf16.msra.mxu0 %v1428
    %1845 = vmatprep.subr.bf16.mxu0 %v1433
    %1846 = vmatpush1.bf16.msra.mxu0 %v1432
    %1847 = vmatprep.mubr.bf16.mxu0 %v403
    %1848 = vmatmul.mubr.bf16.gmra.mrb[0].mxu0 %v401
    %v1849 = vpop.f32.mrb[0].mxu0
    %v1850 = vadd.f32 %v1809, %v1849
    %v1851 = vpop.f32.mrb[0].mxu0
    %v1852 = vadd.f32 %v1811, %v1851
    %v1853 = vpop.f32.mrb[0].mxu0
    %v1854 = vpop.f32.mrb[0].mxu0
    %1855 = vdwg.mxu0
    %1856 = vmatprep.subr.bf16.mxu0 %v1183
    %1857 = vmatpush1.bf16.msra.mxu0 %v1182
    %1858 = vmatprep.subr.bf16.mxu0 %v1187
    %1859 = vmatpush1.bf16.msra.mxu0 %v1186
    %1860 = vmatprep.subr.bf16.mxu0 %v1191
    %1861 = vmatpush1.bf16.msra.mxu0 %v1190
    %1862 = vmatprep.subr.bf16.mxu0 %v1195
    %1863 = vmatpush1.bf16.msra.mxu0 %v1194
    %1864 = vmatprep.subr.bf16.mxu0 %v1199
    %1865 = vmatpush1.bf16.msra.mxu0 %v1198
    %1866 = vmatprep.subr.bf16.mxu0 %v1203
    %1867 = vmatpush1.bf16.msra.mxu0 %v1202
    %1868 = vmatprep.subr.bf16.mxu0 %v1207
    %1869 = vmatpush1.bf16.msra.mxu0 %v1206
    %1870 = vmatprep.subr.bf16.mxu0 %v1211
    %1871 = vmatpush1.bf16.msra.mxu0 %v1210
    %1872 = vmatprep.subr.bf16.mxu0 %v1215
    %1873 = vmatpush1.bf16.msra.mxu0 %v1214
    %1874 = vmatprep.subr.bf16.mxu0 %v1219
    %1875 = vmatpush1.bf16.msra.mxu0 %v1218
    %1876 = vmatprep.subr.bf16.mxu0 %v1223
    %1877 = vmatpush1.bf16.msra.mxu0 %v1222
    %1878 = vmatprep.subr.bf16.mxu0 %v1227
    %1879 = vmatpush1.bf16.msra.mxu0 %v1226
    %1880 = vmatprep.subr.bf16.mxu0 %v1231
    %1881 = vmatpush1.bf16.msra.mxu0 %v1230
    %1882 = vmatprep.subr.bf16.mxu0 %v1235
    %1883 = vmatpush1.bf16.msra.mxu0 %v1234
    %1884 = vmatprep.subr.bf16.mxu0 %v1239
    %1885 = vmatpush1.bf16.msra.mxu0 %v1238
    %1886 = vmatprep.subr.bf16.mxu0 %v1243
    %1887 = vmatpush1.bf16.msra.mxu0 %v1242
    %1888 = vmatprep.mubr.bf16.mxu0 %v392
    %1889 = vmatmul.mubr.bf16.gmra.mrb[0].mxu0 %v378
    %v1890 = vpop.f32.mrb[0].mxu0
    %v1891 = vadd.f32 %v345, %v1890
    %v1892 = vpop.f32.mrb[0].mxu0
    %v1893 = vadd.f32 %v349, %v1892
    %v1894 = vpop.f32.mrb[0].mxu0
    %v1895 = vpop.f32.mrb[0].mxu0
    %1896 = vdwg.mxu0
    %1897 = vmatprep.subr.bf16.mxu0 %v1247
    %1898 = vmatpush1.bf16.msra.mxu0 %v1246
    %1899 = vmatprep.subr.bf16.mxu0 %v1251
    %1900 = vmatpush1.bf16.msra.mxu0 %v1250
    %1901 = vmatprep.subr.bf16.mxu0 %v1255
    %1902 = vmatpush1.bf16.msra.mxu0 %v1254
    %1903 = vmatprep.subr.bf16.mxu0 %v1259
    %1904 = vmatpush1.bf16.msra.mxu0 %v1258
    %1905 = vmatprep.subr.bf16.mxu0 %v1263
    %1906 = vmatpush1.bf16.msra.mxu0 %v1262
    %1907 = vmatprep.subr.bf16.mxu0 %v1267
    %1908 = vmatpush1.bf16.msra.mxu0 %v1266
    %1909 = vmatprep.subr.bf16.mxu0 %v1271
    %1910 = vmatpush1.bf16.msra.mxu0 %v1270
    %1911 = vmatprep.subr.bf16.mxu0 %v1275
    %1912 = vmatpush1.bf16.msra.mxu0 %v1274
    %1913 = vmatprep.subr.bf16.mxu0 %v1279
    %1914 = vmatpush1.bf16.msra.mxu0 %v1278
    %1915 = vmatprep.subr.bf16.mxu0 %v1283
    %1916 = vmatpush1.bf16.msra.mxu0 %v1282
    %1917 = vmatprep.subr.bf16.mxu0 %v1287
    %1918 = vmatpush1.bf16.msra.mxu0 %v1286
    %1919 = vmatprep.subr.bf16.mxu0 %v1291
    %1920 = vmatpush1.bf16.msra.mxu0 %v1290
    %1921 = vmatprep.subr.bf16.mxu0 %v1295
    %1922 = vmatpush1.bf16.msra.mxu0 %v1294
    %1923 = vmatprep.subr.bf16.mxu0 %v1299
    %1924 = vmatpush1.bf16.msra.mxu0 %v1298
    %1925 = vmatprep.subr.bf16.mxu0 %v1303
    %1926 = vmatpush1.bf16.msra.mxu0 %v1302
    %1927 = vmatprep.subr.bf16.mxu0 %v1307
    %1928 = vmatpush1.bf16.msra.mxu0 %v1306
    %1929 = vmatprep.mubr.bf16.mxu0 %v402
    %1930 = vmatmul.mubr.bf16.gmra.mrb[0].mxu0 %v400
    %v1931 = vpop.f32.mrb[0].mxu0
    %v1932 = vadd.f32 %v1891, %v1931
    %v1933 = vpop.f32.mrb[0].mxu0
    %v1934 = vadd.f32 %v1893, %v1933
    %v1935 = vpop.f32.mrb[0].mxu0
    %v1936 = vpop.f32.mrb[0].mxu0
    %1937 = vdwg.mxu0
    %1938 = vmatprep.subr.bf16.mxu0 %v1311
    %1939 = vmatpush1.bf16.msra.mxu0 %v1310
    %1940 = vmatprep.subr.bf16.mxu0 %v1315
    %1941 = vmatpush1.bf16.msra.mxu0 %v1314
    %1942 = vmatprep.subr.bf16.mxu0 %v1319
    %1943 = vmatpush1.bf16.msra.mxu0 %v1318
    %1944 = vmatprep.subr.bf16.mxu0 %v1323
    %1945 = vmatpush1.bf16.msra.mxu0 %v1322
    %1946 = vmatprep.subr.bf16.mxu0 %v1327
    %1947 = vmatpush1.bf16.msra.mxu0 %v1326
    %1948 = vmatprep.subr.bf16.mxu0 %v1331
    %1949 = vmatpush1.bf16.msra.mxu0 %v1330
    %1950 = vmatprep.subr.bf16.mxu0 %v1335
    %1951 = vmatpush1.bf16.msra.mxu0 %v1334
    %1952 = vmatprep.subr.bf16.mxu0 %v1339
    %1953 = vmatpush1.bf16.msra.mxu0 %v1338
    %1954 = vmatprep.subr.bf16.mxu0 %v1343
    %1955 = vmatpush1.bf16.msra.mxu0 %v1342
    %1956 = vmatprep.subr.bf16.mxu0 %v1347
    %1957 = vmatpush1.bf16.msra.mxu0 %v1346
    %1958 = vmatprep.subr.bf16.mxu0 %v1351
    %1959 = vmatpush1.bf16.msra.mxu0 %v1350
    %1960 = vmatprep.subr.bf16.mxu0 %v1355
    %1961 = vmatpush1.bf16.msra.mxu0 %v1354
    %1962 = vmatprep.subr.bf16.mxu0 %v1359
    %1963 = vmatpush1.bf16.msra.mxu0 %v1358
    %1964 = vmatprep.subr.bf16.mxu0 %v1363
    %1965 = vmatpush1.bf16.msra.mxu0 %v1362
    %1966 = vmatprep.subr.bf16.mxu0 %v1367
    %1967 = vmatpush1.bf16.msra.mxu0 %v1366
    %1968 = vmatprep.subr.bf16.mxu0 %v1371
    %1969 = vmatpush1.bf16.msra.mxu0 %v1370
    %1970 = vmatprep.mubr.bf16.mxu0 %v399
    %1971 = vmatmul.mubr.bf16.gmra.mrb[0].mxu0 %v385
    %v1972 = vpop.f32.mrb[0].mxu0
    %v1973 = vadd.f32 %v1932, %v1972
    %v1974 = vpop.f32.mrb[0].mxu0
    %v1975 = vadd.f32 %v1934, %v1974
    %v1976 = vpop.f32.mrb[0].mxu0
    %v1977 = vpop.f32.mrb[0].mxu0
    %1978 = vdwg.mxu0
    %1979 = vmatprep.subr.bf16.mxu0 %v1375
    %1980 = vmatpush1.bf16.msra.mxu0 %v1374
    %1981 = vmatprep.subr.bf16.mxu0 %v1379
    %1982 = vmatpush1.bf16.msra.mxu0 %v1378
    %1983 = vmatprep.subr.bf16.mxu0 %v1383
    %1984 = vmatpush1.bf16.msra.mxu0 %v1382
    %1985 = vmatprep.subr.bf16.mxu0 %v1387
    %1986 = vmatpush1.bf16.msra.mxu0 %v1386
    %1987 = vmatprep.subr.bf16.mxu0 %v1391
    %1988 = vmatpush1.bf16.msra.mxu0 %v1390
    %1989 = vmatprep.subr.bf16.mxu0 %v1395
    %1990 = vmatpush1.bf16.msra.mxu0 %v1394
    %1991 = vmatprep.subr.bf16.mxu0 %v1399
    %1992 = vmatpush1.bf16.msra.mxu0 %v1398
    %1993 = vmatprep.subr.bf16.mxu0 %v1403
    %1994 = vmatpush1.bf16.msra.mxu0 %v1402
    %1995 = vmatprep.subr.bf16.mxu0 %v1407
    %1996 = vmatpush1.bf16.msra.mxu0 %v1406
    %1997 = vmatprep.subr.bf16.mxu0 %v1411
    %1998 = vmatpush1.bf16.msra.mxu0 %v1410
    %1999 = vmatprep.subr.bf16.mxu0 %v1415
    %2000 = vmatpush1.bf16.msra.mxu0 %v1414
    %2001 = vmatprep.subr.bf16.mxu0 %v1419
    %2002 = vmatpush1.bf16.msra.mxu0 %v1418
    %2003 = vmatprep.subr.bf16.mxu0 %v1423
    %2004 = vmatpush1.bf16.msra.mxu0 %v1422
    %2005 = vmatprep.subr.bf16.mxu0 %v1427
    %2006 = vmatpush1.bf16.msra.mxu0 %v1426
    %2007 = vmatprep.subr.bf16.mxu0 %v1431
    %2008 = vmatpush1.bf16.msra.mxu0 %v1430
    %2009 = vmatprep.subr.bf16.mxu0 %v1435
    %2010 = vmatpush1.bf16.msra.mxu0 %v1434
    %2011 = vmatprep.mubr.bf16.mxu0 %v403
    %2012 = vmatmul.mubr.bf16.gmra.mrb[0].mxu0 %v401
    %v2013 = vpop.f32.mrb[0].mxu0
    %v2014 = vadd.f32 %v1973, %v2013
    %v2015 = vpop.f32.mrb[0].mxu0
    %v2016 = vadd.f32 %v1975, %v2015
    %v2017 = vpop.f32.mrb[0].mxu0
    %v2018 = vpop.f32.mrb[0].mxu0
    %2019 = vdwg.mxu0
    %v2020 = vmax.f32 %v1850, 0.0
    %v2021 = vmax.f32 %v1852, 0.0
    %v2022 = vmax.f32 %v2014, 0.0
    %v2023 = vmax.f32 %v2016, 0.0
    %v2024 = vpack.c.bf16 %v2020, %v2020
    %v2025 = vpack.c.bf16 %v2021, %v2021
    %v2026 = vpack.c.bf16 %v2022, %v2022
    %v2027 = vpack.c.bf16 %v2023, %v2023
    %v2028 = vld [vmem:[#allocation5] sm:$0xff]
    %v2029 = vld [vmem:[#allocation5 + $0x8] sm:$0xff]
    %v2030 = vld [vmem:[#allocation5 + $0x10] sm:$0xff]
    %v2031 = vld [vmem:[#allocation5 + $0x18] sm:$0xff]
    %v2032 = vld [vmem:[#allocation5 + $0x20] sm:$0xff]
    %v2033 = vld [vmem:[#allocation5 + $0x28] sm:$0xff]
    %v2034 = vld [vmem:[#allocation5 + $0x30] sm:$0xff]
    %v2035 = vld [vmem:[#allocation5 + $0x38] sm:$0xff]
    %v2036 = vld [vmem:[#allocation5 + $0x40] sm:$0xff]
    %v2037 = vld [vmem:[#allocation5 + $0x48] sm:$0xff]
    %v2038 = vld [vmem:[#allocation5 + $0x50] sm:$0xff]
    %v2039 = vld [vmem:[#allocation5 + $0x58] sm:$0xff]
    %v2040 = vld [vmem:[#allocation5 + $0x60] sm:$0xff]
    %v2041 = vld [vmem:[#allocation5 + $0x68] sm:$0xff]
    %v2042 = vld [vmem:[#allocation5 + $0x70] sm:$0xff]
    %v2043 = vld [vmem:[#allocation5 + $0x78] sm:$0xff]
    %v2044 = vld [vmem:[#allocation5 + $0x80] sm:$0xff]
    %v2045 = vld [vmem:[#allocation5 + $0x88] sm:$0xff]
    %v2046 = vld [vmem:[#allocation5 + $0x90] sm:$0xff]
    %v2047 = vld [vmem:[#allocation5 + $0x98] sm:$0xff]
    %v2048 = vld [vmem:[#allocation5 + $0xa0] sm:$0xff]
    %v2049 = vld [vmem:[#allocation5 + $0xa8] sm:$0xff]
    %v2050 = vld [vmem:[#allocation5 + $0xb0] sm:$0xff]
    %v2051 = vld [vmem:[#allocation5 + $0xb8] sm:$0xff]
    %v2052 = vld [vmem:[#allocation5 + $0xc0] sm:$0xff]
    %v2053 = vld [vmem:[#allocation5 + $0xc8] sm:$0xff]
    %v2054 = vld [vmem:[#allocation5 + $0xd0] sm:$0xff]
    %v2055 = vld [vmem:[#allocation5 + $0xd8] sm:$0xff]
    %v2056 = vld [vmem:[#allocation5 + $0xe0] sm:$0xff]
    %v2057 = vld [vmem:[#allocation5 + $0xe8] sm:$0xff]
    %v2058 = vld [vmem:[#allocation5 + $0xf0] sm:$0xff]
    %v2059 = vld [vmem:[#allocation5 + $0xf8] sm:$0xff]
    %v2060 = vld [vmem:[#allocation5 + $0x100] sm:$0xff]
    %v2061 = vld [vmem:[#allocation5 + $0x108] sm:$0xff]
    %v2062 = vld [vmem:[#allocation5 + $0x110] sm:$0xff]
    %v2063 = vld [vmem:[#allocation5 + $0x118] sm:$0xff]
    %v2064 = vld [vmem:[#allocation5 + $0x120] sm:$0xff]
    %v2065 = vld [vmem:[#allocation5 + $0x128] sm:$0xff]
    %v2066 = vld [vmem:[#allocation5 + $0x130] sm:$0xff]
    %v2067 = vld [vmem:[#allocation5 + $0x138] sm:$0xff]
    %v2068 = vld [vmem:[#allocation5 + $0x140] sm:$0xff]
    %v2069 = vld [vmem:[#allocation5 + $0x148] sm:$0xff]
    %v2070 = vld [vmem:[#allocation5 + $0x150] sm:$0xff]
    %v2071 = vld [vmem:[#allocation5 + $0x158] sm:$0xff]
    %v2072 = vld [vmem:[#allocation5 + $0x160] sm:$0xff]
    %v2073 = vld [vmem:[#allocation5 + $0x168] sm:$0xff]
    %v2074 = vld [vmem:[#allocation5 + $0x170] sm:$0xff]
    %v2075 = vld [vmem:[#allocation5 + $0x178] sm:$0xff]
    %v2076 = vld [vmem:[#allocation5 + $0x180] sm:$0xff]
    %v2077 = vld [vmem:[#allocation5 + $0x188] sm:$0xff]
    %v2078 = vld [vmem:[#allocation5 + $0x190] sm:$0xff]
    %v2079 = vld [vmem:[#allocation5 + $0x198] sm:$0xff]
    %v2080 = vld [vmem:[#allocation5 + $0x1a0] sm:$0xff]
    %v2081 = vld [vmem:[#allocation5 + $0x1a8] sm:$0xff]
    %v2082 = vld [vmem:[#allocation5 + $0x1b0] sm:$0xff]
    %v2083 = vld [vmem:[#allocation5 + $0x1b8] sm:$0xff]
    %v2084 = vld [vmem:[#allocation5 + $0x1c0] sm:$0xff]
    %v2085 = vld [vmem:[#allocation5 + $0x1c8] sm:$0xff]
    %v2086 = vld [vmem:[#allocation5 + $0x1d0] sm:$0xff]
    %v2087 = vld [vmem:[#allocation5 + $0x1d8] sm:$0xff]
    %v2088 = vld [vmem:[#allocation5 + $0x1e0] sm:$0xff]
    %v2089 = vld [vmem:[#allocation5 + $0x1e8] sm:$0xff]
    %v2090 = vld [vmem:[#allocation5 + $0x1f0] sm:$0xff]
    %v2091 = vld [vmem:[#allocation5 + $0x1f8] sm:$0xff]
    %v2092 = vld [vmem:[%s4] sm:$0x3]
    %v2094 = vlaneseq
    %v2095 = vshrl.u32 %v2094, 7
    %v2096 = vsub.s32 0, %v2095
    %v2097 = vrot.slane %v2092, %v2096
    %v2098 = vlaneseq
    %v2099 = vshrl.u32 %v2098, 7
    %v2100 = vsub.s32 1, %v2099
    %v2101 = vrot.slane %v2092, %v2100
    %v2168 = vunpack.c.l.b16 %v2028
    %v2169 = vunpack.c.h.b16 %v2028
    %v2170 = vunpack.c.l.b16 %v2029
    %v2171 = vunpack.c.h.b16 %v2029
    %v2172 = vunpack.c.l.b16 %v2030
    %v2173 = vunpack.c.h.b16 %v2030
    %v2174 = vunpack.c.l.b16 %v2031
    %v2175 = vunpack.c.h.b16 %v2031
    %v2176 = vunpack.c.l.b16 %v2032
    %v2177 = vunpack.c.h.b16 %v2032
    %v2178 = vunpack.c.l.b16 %v2033
    %v2179 = vunpack.c.h.b16 %v2033
    %v2180 = vunpack.c.l.b16 %v2034
    %v2181 = vunpack.c.h.b16 %v2034
    %v2182 = vunpack.c.l.b16 %v2035
    %v2183 = vunpack.c.h.b16 %v2035
    %v2184 = vunpack.c.l.b16 %v2036
    %v2185 = vunpack.c.h.b16 %v2036
    %v2186 = vunpack.c.l.b16 %v2037
    %v2187 = vunpack.c.h.b16 %v2037
    %v2188 = vunpack.c.l.b16 %v2038
    %v2189 = vunpack.c.h.b16 %v2038
    %v2190 = vunpack.c.l.b16 %v2039
    %v2191 = vunpack.c.h.b16 %v2039
    %v2192 = vunpack.c.l.b16 %v2040
    %v2193 = vunpack.c.h.b16 %v2040
    %v2194 = vunpack.c.l.b16 %v2041
    %v2195 = vunpack.c.h.b16 %v2041
    %v2196 = vunpack.c.l.b16 %v2042
    %v2197 = vunpack.c.h.b16 %v2042
    %v2198 = vunpack.c.l.b16 %v2043
    %v2199 = vunpack.c.h.b16 %v2043
    %v2200 = vunpack.c.l.b16 %v2044
    %v2201 = vunpack.c.h.b16 %v2044
    %v2202 = vunpack.c.l.b16 %v2045
    %v2203 = vunpack.c.h.b16 %v2045
    %v2204 = vunpack.c.l.b16 %v2046
    %v2205 = vunpack.c.h.b16 %v2046
    %v2206 = vunpack.c.l.b16 %v2047
    %v2207 = vunpack.c.h.b16 %v2047
    %v2208 = vunpack.c.l.b16 %v2048
    %v2209 = vunpack.c.h.b16 %v2048
    %v2210 = vunpack.c.l.b16 %v2049
    %v2211 = vunpack.c.h.b16 %v2049
    %v2212 = vunpack.c.l.b16 %v2050
    %v2213 = vunpack.c.h.b16 %v2050
    %v2214 = vunpack.c.l.b16 %v2051
    %v2215 = vunpack.c.h.b16 %v2051
    %v2216 = vunpack.c.l.b16 %v2052
    %v2217 = vunpack.c.h.b16 %v2052
    %v2218 = vunpack.c.l.b16 %v2053
    %v2219 = vunpack.c.h.b16 %v2053
    %v2220 = vunpack.c.l.b16 %v2054
    %v2221 = vunpack.c.h.b16 %v2054
    %v2222 = vunpack.c.l.b16 %v2055
    %v2223 = vunpack.c.h.b16 %v2055
    %v2224 = vunpack.c.l.b16 %v2056
    %v2225 = vunpack.c.h.b16 %v2056
    %v2226 = vunpack.c.l.b16 %v2057
    %v2227 = vunpack.c.h.b16 %v2057
    %v2228 = vunpack.c.l.b16 %v2058
    %v2229 = vunpack.c.h.b16 %v2058
    %v2230 = vunpack.c.l.b16 %v2059
    %v2231 = vunpack.c.h.b16 %v2059
    %v2232 = vunpack.c.l.b16 %v2060
    %v2233 = vunpack.c.h.b16 %v2060
    %v2234 = vunpack.c.l.b16 %v2061
    %v2235 = vunpack.c.h.b16 %v2061
    %v2236 = vunpack.c.l.b16 %v2062
    %v2237 = vunpack.c.h.b16 %v2062
    %v2238 = vunpack.c.l.b16 %v2063
    %v2239 = vunpack.c.h.b16 %v2063
    %v2240 = vunpack.c.l.b16 %v2064
    %v2241 = vunpack.c.h.b16 %v2064
    %v2242 = vunpack.c.l.b16 %v2065
    %v2243 = vunpack.c.h.b16 %v2065
    %v2244 = vunpack.c.l.b16 %v2066
    %v2245 = vunpack.c.h.b16 %v2066
    %v2246 = vunpack.c.l.b16 %v2067
    %v2247 = vunpack.c.h.b16 %v2067
    %v2248 = vunpack.c.l.b16 %v2068
    %v2249 = vunpack.c.h.b16 %v2068
    %v2250 = vunpack.c.l.b16 %v2069
    %v2251 = vunpack.c.h.b16 %v2069
    %v2252 = vunpack.c.l.b16 %v2070
    %v2253 = vunpack.c.h.b16 %v2070
    %v2254 = vunpack.c.l.b16 %v2071
    %v2255 = vunpack.c.h.b16 %v2071
    %v2256 = vunpack.c.l.b16 %v2072
    %v2257 = vunpack.c.h.b16 %v2072
    %v2258 = vunpack.c.l.b16 %v2073
    %v2259 = vunpack.c.h.b16 %v2073
    %v2260 = vunpack.c.l.b16 %v2074
    %v2261 = vunpack.c.h.b16 %v2074
    %v2262 = vunpack.c.l.b16 %v2075
    %v2263 = vunpack.c.h.b16 %v2075
    %v2264 = vunpack.c.l.b16 %v2076
    %v2265 = vunpack.c.h.b16 %v2076
    %v2266 = vunpack.c.l.b16 %v2077
    %v2267 = vunpack.c.h.b16 %v2077
    %v2268 = vunpack.c.l.b16 %v2078
    %v2269 = vunpack.c.h.b16 %v2078
    %v2270 = vunpack.c.l.b16 %v2079
    %v2271 = vunpack.c.h.b16 %v2079
    %v2272 = vunpack.c.l.b16 %v2080
    %v2273 = vunpack.c.h.b16 %v2080
    %v2274 = vunpack.c.l.b16 %v2081
    %v2275 = vunpack.c.h.b16 %v2081
    %v2276 = vunpack.c.l.b16 %v2082
    %v2277 = vunpack.c.h.b16 %v2082
    %v2278 = vunpack.c.l.b16 %v2083
    %v2279 = vunpack.c.h.b16 %v2083
    %v2280 = vunpack.c.l.b16 %v2084
    %v2281 = vunpack.c.h.b16 %v2084
    %v2282 = vunpack.c.l.b16 %v2085
    %v2283 = vunpack.c.h.b16 %v2085
    %v2284 = vunpack.c.l.b16 %v2086
    %v2285 = vunpack.c.h.b16 %v2086
    %v2286 = vunpack.c.l.b16 %v2087
    %v2287 = vunpack.c.h.b16 %v2087
    %v2288 = vunpack.c.l.b16 %v2088
    %v2289 = vunpack.c.h.b16 %v2088
    %v2290 = vunpack.c.l.b16 %v2089
    %v2291 = vunpack.c.h.b16 %v2089
    %v2292 = vunpack.c.l.b16 %v2090
    %v2293 = vunpack.c.h.b16 %v2090
    %v2294 = vunpack.c.l.b16 %v2091
    %v2295 = vunpack.c.h.b16 %v2091
    %v2296 = vpack.c.b16 %v2170, %v2168
    %v2297 = vpack.c.b16 %v2171, %v2169
    %v2298 = vpack.c.b16 %v2174, %v2172
    %v2299 = vpack.c.b16 %v2175, %v2173
    %v2300 = vpack.c.b16 %v2178, %v2176
    %v2301 = vpack.c.b16 %v2179, %v2177
    %v2302 = vpack.c.b16 %v2182, %v2180
    %v2303 = vpack.c.b16 %v2183, %v2181
    %v2304 = vpack.c.b16 %v2186, %v2184
    %v2305 = vpack.c.b16 %v2187, %v2185
    %v2306 = vpack.c.b16 %v2190, %v2188
    %v2307 = vpack.c.b16 %v2191, %v2189
    %v2308 = vpack.c.b16 %v2194, %v2192
    %v2309 = vpack.c.b16 %v2195, %v2193
    %v2310 = vpack.c.b16 %v2198, %v2196
    %v2311 = vpack.c.b16 %v2199, %v2197
    %v2312 = vpack.c.b16 %v2202, %v2200
    %v2313 = vpack.c.b16 %v2203, %v2201
    %v2314 = vpack.c.b16 %v2206, %v2204
    %v2315 = vpack.c.b16 %v2207, %v2205
    %v2316 = vpack.c.b16 %v2210, %v2208
    %v2317 = vpack.c.b16 %v2211, %v2209
    %v2318 = vpack.c.b16 %v2214, %v2212
    %v2319 = vpack.c.b16 %v2215, %v2213
    %v2320 = vpack.c.b16 %v2218, %v2216
    %v2321 = vpack.c.b16 %v2219, %v2217
    %v2322 = vpack.c.b16 %v2222, %v2220
    %v2323 = vpack.c.b16 %v2223, %v2221
    %v2324 = vpack.c.b16 %v2226, %v2224
    %v2325 = vpack.c.b16 %v2227, %v2225
    %v2326 = vpack.c.b16 %v2230, %v2228
    %v2327 = vpack.c.b16 %v2231, %v2229
    %v2328 = vpack.c.b16 %v2234, %v2232
    %v2329 = vpack.c.b16 %v2235, %v2233
    %v2330 = vpack.c.b16 %v2238, %v2236
    %v2331 = vpack.c.b16 %v2239, %v2237
    %v2332 = vpack.c.b16 %v2242, %v2240
    %v2333 = vpack.c.b16 %v2243, %v2241
    %v2334 = vpack.c.b16 %v2246, %v2244
    %v2335 = vpack.c.b16 %v2247, %v2245
    %v2336 = vpack.c.b16 %v2250, %v2248
    %v2337 = vpack.c.b16 %v2251, %v2249
    %v2338 = vpack.c.b16 %v2254, %v2252
    %v2339 = vpack.c.b16 %v2255, %v2253
    %v2340 = vpack.c.b16 %v2258, %v2256
    %v2341 = vpack.c.b16 %v2259, %v2257
    %v2342 = vpack.c.b16 %v2262, %v2260
    %v2343 = vpack.c.b16 %v2263, %v2261
    %v2344 = vpack.c.b16 %v2266, %v2264
    %v2345 = vpack.c.b16 %v2267, %v2265
    %v2346 = vpack.c.b16 %v2270, %v2268
    %v2347 = vpack.c.b16 %v2271, %v2269
    %v2348 = vpack.c.b16 %v2274, %v2272
    %v2349 = vpack.c.b16 %v2275, %v2273
    %v2350 = vpack.c.b16 %v2278, %v2276
    %v2351 = vpack.c.b16 %v2279, %v2277
    %v2352 = vpack.c.b16 %v2282, %v2280
    %v2353 = vpack.c.b16 %v2283, %v2281
    %v2354 = vpack.c.b16 %v2286, %v2284
    %v2355 = vpack.c.b16 %v2287, %v2285
    %v2356 = vpack.c.b16 %v2290, %v2288
    %v2357 = vpack.c.b16 %v2291, %v2289
    %v2358 = vpack.c.b16 %v2294, %v2292
    %v2359 = vpack.c.b16 %v2295, %v2293
    %2424 = vmatprep.subr.bf16.mxu0 %v2297
    %2425 = vmatpush1.bf16.msra.mxu0 %v2296
    %2426 = vmatprep.subr.bf16.mxu0 %v2299
    %2427 = vmatpush1.bf16.msra.mxu0 %v2298
    %2428 = vmatprep.subr.bf16.mxu0 %v2301
    %2429 = vmatpush1.bf16.msra.mxu0 %v2300
    %2430 = vmatprep.subr.bf16.mxu0 %v2303
    %2431 = vmatpush1.bf16.msra.mxu0 %v2302
    %2432 = vmatprep.subr.bf16.mxu0 %v2305
    %2433 = vmatpush1.bf16.msra.mxu0 %v2304
    %2434 = vmatprep.subr.bf16.mxu0 %v2307
    %2435 = vmatpush1.bf16.msra.mxu0 %v2306
    %2436 = vmatprep.subr.bf16.mxu0 %v2309
    %2437 = vmatpush1.bf16.msra.mxu0 %v2308
    %2438 = vmatprep.subr.bf16.mxu0 %v2311
    %2439 = vmatpush1.bf16.msra.mxu0 %v2310
    %2440 = vmatprep.subr.bf16.mxu0 %v2313
    %2441 = vmatpush1.bf16.msra.mxu0 %v2312
    %2442 = vmatprep.subr.bf16.mxu0 %v2315
    %2443 = vmatpush1.bf16.msra.mxu0 %v2314
    %2444 = vmatprep.subr.bf16.mxu0 %v2317
    %2445 = vmatpush1.bf16.msra.mxu0 %v2316
    %2446 = vmatprep.subr.bf16.mxu0 %v2319
    %2447 = vmatpush1.bf16.msra.mxu0 %v2318
    %2448 = vmatprep.subr.bf16.mxu0 %v2321
    %2449 = vmatpush1.bf16.msra.mxu0 %v2320
    %2450 = vmatprep.subr.bf16.mxu0 %v2323
    %2451 = vmatpush1.bf16.msra.mxu0 %v2322
    %2452 = vmatprep.subr.bf16.mxu0 %v2325
    %2453 = vmatpush1.bf16.msra.mxu0 %v2324
    %2454 = vmatprep.subr.bf16.mxu0 %v2327
    %2455 = vmatpush1.bf16.msra.mxu0 %v2326
    %2456 = vmatprep.mubr.bf16.mxu0 %v2025
    %2457 = vmatmul.mubr.bf16.gmra.mrb[0].mxu0 %v2024
    %v2458 = vpop.f32.mrb[0].mxu0
    %v2459 = vadd.f32 %v2097, %v2458
    %v2460 = vpop.f32.mrb[0].mxu0
    %v2461 = vadd.f32 %v2101, %v2460
    %v2462 = vpop.f32.mrb[0].mxu0
    %v2463 = vpop.f32.mrb[0].mxu0
    %2464 = vdwg.mxu0
    %2465 = vmatprep.subr.bf16.mxu0 %v2329
    %2466 = vmatpush1.bf16.msra.mxu0 %v2328
    %2467 = vmatprep.subr.bf16.mxu0 %v2331
    %2468 = vmatpush1.bf16.msra.mxu0 %v2330
    %2469 = vmatprep.subr.bf16.mxu0 %v2333
    %2470 = vmatpush1.bf16.msra.mxu0 %v2332
    %2471 = vmatprep.subr.bf16.mxu0 %v2335
    %2472 = vmatpush1.bf16.msra.mxu0 %v2334
    %2473 = vmatprep.subr.bf16.mxu0 %v2337
    %2474 = vmatpush1.bf16.msra.mxu0 %v2336
    %2475 = vmatprep.subr.bf16.mxu0 %v2339
    %2476 = vmatpush1.bf16.msra.mxu0 %v2338
    %2477 = vmatprep.subr.bf16.mxu0 %v2341
    %2478 = vmatpush1.bf16.msra.mxu0 %v2340
    %2479 = vmatprep.subr.bf16.mxu0 %v2343
    %2480 = vmatpush1.bf16.msra.mxu0 %v2342
    %2481 = vmatprep.subr.bf16.mxu0 %v2345
    %2482 = vmatpush1.bf16.msra.mxu0 %v2344
    %2483 = vmatprep.subr.bf16.mxu0 %v2347
    %2484 = vmatpush1.bf16.msra.mxu0 %v2346
    %2485 = vmatprep.subr.bf16.mxu0 %v2349
    %2486 = vmatpush1.bf16.msra.mxu0 %v2348
    %2487 = vmatprep.subr.bf16.mxu0 %v2351
    %2488 = vmatpush1.bf16.msra.mxu0 %v2350
    %2489 = vmatprep.subr.bf16.mxu0 %v2353
    %2490 = vmatpush1.bf16.msra.mxu0 %v2352
    %2491 = vmatprep.subr.bf16.mxu0 %v2355
    %2492 = vmatpush1.bf16.msra.mxu0 %v2354
    %2493 = vmatprep.subr.bf16.mxu0 %v2357
    %2494 = vmatpush1.bf16.msra.mxu0 %v2356
    %2495 = vmatprep.subr.bf16.mxu0 %v2359
    %2496 = vmatpush1.bf16.msra.mxu0 %v2358
    %2497 = vmatprep.mubr.bf16.mxu0 %v2027
    %2498 = vmatmul.mubr.bf16.gmra.mrb[0].mxu0 %v2026
    %v2499 = vpop.f32.mrb[0].mxu0
    %v2500 = vadd.f32 %v2459, %v2499
    %v2501 = vpop.f32.mrb[0].mxu0
    %v2502 = vadd.f32 %v2461, %v2501
    %v2503 = vpop.f32.mrb[0].mxu0
    %v2504 = vpop.f32.mrb[0].mxu0
    %2505 = vdwg.mxu0
    %v2506 = vmax.f32 %v2500, 0.0
    %v2507 = vmax.f32 %v2502, 0.0
    %v2508 = vpack.c.bf16 %v2506, %v2506
    %v2509 = vpack.c.bf16 %v2507, %v2507
    %v2510 = vld [vmem:[#allocation7] sm:$0xf]
    %v2511 = vld [vmem:[#allocation7 + $0x4] sm:$0xf]
    %v2512 = vld [vmem:[#allocation7 + $0x8] sm:$0xf]
    %v2513 = vld [vmem:[#allocation7 + $0xc] sm:$0xf]
    %v2514 = vld [vmem:[#allocation7 + $0x10] sm:$0xf]
    %v2515 = vld [vmem:[#allocation7 + $0x14] sm:$0xf]
    %v2516 = vld [vmem:[#allocation7 + $0x18] sm:$0xf]
    %v2517 = vld [vmem:[#allocation7 + $0x1c] sm:$0xf]
    %v2518 = vld [vmem:[#allocation7 + $0x20] sm:$0xf]
    %v2519 = vld [vmem:[#allocation7 + $0x24] sm:$0xf]
    %v2520 = vld [vmem:[#allocation7 + $0x28] sm:$0xf]
    %v2521 = vld [vmem:[#allocation7 + $0x2c] sm:$0xf]
    %v2522 = vld [vmem:[#allocation7 + $0x30] sm:$0xf]
    %v2523 = vld [vmem:[#allocation7 + $0x34] sm:$0xf]
    %v2524 = vld [vmem:[#allocation7 + $0x38] sm:$0xf]
    %v2525 = vld [vmem:[#allocation7 + $0x3c] sm:$0xf]
    %v2526 = vld [vmem:[#allocation7 + $0x40] sm:$0xf]
    %v2527 = vld [vmem:[#allocation7 + $0x44] sm:$0xf]
    %v2528 = vld [vmem:[#allocation7 + $0x48] sm:$0xf]
    %v2529 = vld [vmem:[#allocation7 + $0x4c] sm:$0xf]
    %v2530 = vld [vmem:[#allocation7 + $0x50] sm:$0xf]
    %v2531 = vld [vmem:[#allocation7 + $0x54] sm:$0xf]
    %v2532 = vld [vmem:[#allocation7 + $0x58] sm:$0xf]
    %v2533 = vld [vmem:[#allocation7 + $0x5c] sm:$0xf]
    %v2534 = vld [vmem:[#allocation7 + $0x60] sm:$0xf]
    %v2535 = vld [vmem:[#allocation7 + $0x64] sm:$0xf]
    %v2536 = vld [vmem:[#allocation7 + $0x68] sm:$0xf]
    %v2537 = vld [vmem:[#allocation7 + $0x6c] sm:$0xf]
    %v2538 = vld [vmem:[#allocation7 + $0x70] sm:$0xf]
    %v2539 = vld [vmem:[#allocation7 + $0x74] sm:$0xf]
    %v2540 = vld [vmem:[#allocation7 + $0x78] sm:$0xf]
    %v2541 = vld [vmem:[#allocation7 + $0x7c] sm:$0xf]
    %v2542 = vld [vmem:[%s6] sm:$0x1]
    %v2544 = vlaneseq
    %v2545 = vshrl.u32 %v2544, 7
    %v2546 = vsub.s32 0, %v2545
    %v2547 = vrot.slane %v2542, %v2546
    %v2581 = vunpack.c.l.b16 %v2510
    %v2582 = vunpack.c.l.b16 %v2511
    %v2583 = vunpack.c.l.b16 %v2512
    %v2584 = vunpack.c.l.b16 %v2513
    %v2585 = vunpack.c.l.b16 %v2514
    %v2586 = vunpack.c.l.b16 %v2515
    %v2587 = vunpack.c.l.b16 %v2516
    %v2588 = vunpack.c.l.b16 %v2517
    %v2589 = vunpack.c.l.b16 %v2518
    %v2590 = vunpack.c.l.b16 %v2519
    %v2591 = vunpack.c.l.b16 %v2520
    %v2592 = vunpack.c.l.b16 %v2521
    %v2593 = vunpack.c.l.b16 %v2522
    %v2594 = vunpack.c.l.b16 %v2523
    %v2595 = vunpack.c.l.b16 %v2524
    %v2596 = vunpack.c.l.b16 %v2525
    %v2597 = vunpack.c.l.b16 %v2526
    %v2598 = vunpack.c.l.b16 %v2527
    %v2599 = vunpack.c.l.b16 %v2528
    %v2600 = vunpack.c.l.b16 %v2529
    %v2601 = vunpack.c.l.b16 %v2530
    %v2602 = vunpack.c.l.b16 %v2531
    %v2603 = vunpack.c.l.b16 %v2532
    %v2604 = vunpack.c.l.b16 %v2533
    %v2605 = vunpack.c.l.b16 %v2534
    %v2606 = vunpack.c.l.b16 %v2535
    %v2607 = vunpack.c.l.b16 %v2536
    %v2608 = vunpack.c.l.b16 %v2537
    %v2609 = vunpack.c.l.b16 %v2538
    %v2610 = vunpack.c.l.b16 %v2539
    %v2611 = vunpack.c.l.b16 %v2540
    %v2612 = vunpack.c.l.b16 %v2541
    %v2613 = vpack.c.b16 %v2582, %v2581
    %v2614 = vpack.c.b16 %v2584, %v2583
    %v2615 = vpack.c.b16 %v2586, %v2585
    %v2616 = vpack.c.b16 %v2588, %v2587
    %v2617 = vpack.c.b16 %v2590, %v2589
    %v2618 = vpack.c.b16 %v2592, %v2591
    %v2619 = vpack.c.b16 %v2594, %v2593
    %v2620 = vpack.c.b16 %v2596, %v2595
    %v2621 = vpack.c.b16 %v2598, %v2597
    %v2622 = vpack.c.b16 %v2600, %v2599
    %v2623 = vpack.c.b16 %v2602, %v2601
    %v2624 = vpack.c.b16 %v2604, %v2603
    %v2625 = vpack.c.b16 %v2606, %v2605
    %v2626 = vpack.c.b16 %v2608, %v2607
    %v2627 = vpack.c.b16 %v2610, %v2609
    %v2628 = vpack.c.b16 %v2612, %v2611
    %2645 = vmatprep.subr.bf16.mxu0 0
    %2646 = vmatpush1.bf16.msra.mxu0 %v2613
    %2647 = vmatprep.subr.bf16.mxu0 0
    %2648 = vmatpush1.bf16.msra.mxu0 %v2614
    %2649 = vmatprep.subr.bf16.mxu0 0
    %2650 = vmatpush1.bf16.msra.mxu0 %v2615
    %2651 = vmatprep.subr.bf16.mxu0 0
    %2652 = vmatpush1.bf16.msra.mxu0 %v2616
    %2653 = vmatprep.subr.bf16.mxu0 0
    %2654 = vmatpush1.bf16.msra.mxu0 %v2617
    %2655 = vmatprep.subr.bf16.mxu0 0
    %2656 = vmatpush1.bf16.msra.mxu0 %v2618
    %2657 = vmatprep.subr.bf16.mxu0 0
    %2658 = vmatpush1.bf16.msra.mxu0 %v2619
    %2659 = vmatprep.subr.bf16.mxu0 0
    %2660 = vmatpush1.bf16.msra.mxu0 %v2620
    %2661 = vmatprep.subr.bf16.mxu0 0
    %2662 = vmatpush1.bf16.msra.mxu0 %v2621
    %2663 = vmatprep.subr.bf16.mxu0 0
    %2664 = vmatpush1.bf16.msra.mxu0 %v2622
    %2665 = vmatprep.subr.bf16.mxu0 0
    %2666 = vmatpush1.bf16.msra.mxu0 %v2623
    %2667 = vmatprep.subr.bf16.mxu0 0
    %2668 = vmatpush1.bf16.msra.mxu0 %v2624
    %2669 = vmatprep.subr.bf16.mxu0 0
    %2670 = vmatpush1.bf16.msra.mxu0 %v2625
    %2671 = vmatprep.subr.bf16.mxu0 0
    %2672 = vmatpush1.bf16.msra.mxu0 %v2626
    %2673 = vmatprep.subr.bf16.mxu0 0
    %2674 = vmatpush1.bf16.msra.mxu0 %v2627
    %2675 = vmatprep.subr.bf16.mxu0 0
    %2676 = vmatpush1.bf16.msra.mxu0 %v2628
    %2677 = vmatprep.mubr.bf16.mxu0 %v2509
    %2678 = vmatmul.mubr.bf16.gmra.mrb[0].mxu0 %v2508
    %v2679 = vpop.f32.mrb[0].mxu0
    %v2680 = vadd.f32 %v2547, %v2679
    %v2681 = vpop.f32.mrb[0].mxu0
    %v2682 = vpop.f32.mrb[0].mxu0
    %v2683 = vpop.f32.mrb[0].mxu0
    %2684 = vdwg.mxu0
    %v2685 = vmax.f32 %v2680, 0.0
    %v2686 = vpack.c.bf16 %v2685, %v2685
    %v2687 = vld [vmem:[%s7] sm:$0xf]
    %v2688 = vld [vmem:[%s7 + $0x4] sm:$0xf]
    %v2689 = vld [vmem:[%s7 + $0x8] sm:$0xf]
    %v2690 = vld [vmem:[%s7 + $0xc] sm:$0xf]
    %v2691 = vld [vmem:[%s7 + $0x10] sm:$0xf]
    %v2692 = vld [vmem:[%s7 + $0x14] sm:$0xf]
    %v2693 = vld [vmem:[%s7 + $0x18] sm:$0xf]
    %v2694 = vld [vmem:[%s7 + $0x1c] sm:$0xf]
    %v2695 = vld [vmem:[%s7 + $0x20] sm:$0xf]
    %v2696 = vld [vmem:[%s7 + $0x24] sm:$0xf]
    %v2697 = vld [vmem:[%s7 + $0x28] sm:$0xf]
    %v2698 = vld [vmem:[%s7 + $0x2c] sm:$0xf]
    %v2699 = vld [vmem:[%s7 + $0x30] sm:$0xf]
    %v2700 = vld [vmem:[%s7 + $0x34] sm:$0xf]
    %v2701 = vld [vmem:[%s7 + $0x38] sm:$0xf]
    %v2702 = vld [vmem:[%s7 + $0x3c] sm:$0xf]
    %v2703 = vld [vmem:[%s8] sm:$0x1]
    %v2705 = vlaneseq
    %v2706 = vshrl.u32 %v2705, 7
    %v2707 = vsub.s32 0, %v2706
    %v2708 = vrot.slane %v2703, %v2707
    %v2726 = vunpack.c.l.b16 %v2687
    %v2727 = vunpack.c.l.b16 %v2688
    %v2728 = vunpack.c.l.b16 %v2689
    %v2729 = vunpack.c.l.b16 %v2690
    %v2730 = vunpack.c.l.b16 %v2691
    %v2731 = vunpack.c.l.b16 %v2692
    %v2732 = vunpack.c.l.b16 %v2693
    %v2733 = vunpack.c.l.b16 %v2694
    %v2734 = vunpack.c.l.b16 %v2695
    %v2735 = vunpack.c.l.b16 %v2696
    %v2736 = vunpack.c.l.b16 %v2697
    %v2737 = vunpack.c.l.b16 %v2698
    %v2738 = vunpack.c.l.b16 %v2699
    %v2739 = vunpack.c.l.b16 %v2700
    %v2740 = vunpack.c.l.b16 %v2701
    %v2741 = vunpack.c.l.b16 %v2702
    %v2742 = vpack.c.b16 %v2727, %v2726
    %v2743 = vpack.c.b16 %v2729, %v2728
    %v2744 = vpack.c.b16 %v2731, %v2730
    %v2745 = vpack.c.b16 %v2733, %v2732
    %v2746 = vpack.c.b16 %v2735, %v2734
    %v2747 = vpack.c.b16 %v2737, %v2736
    %v2748 = vpack.c.b16 %v2739, %v2738
    %v2749 = vpack.c.b16 %v2741, %v2740
    %2758 = vmatprep.subr.bf16.mxu0 0
    %2759 = vmatpush1.bf16.msra.mxu0 %v2742
    %2760 = vmatprep.subr.bf16.mxu0 0
    %2761 = vmatpush1.bf16.msra.mxu0 %v2743
    %2762 = vmatprep.subr.bf16.mxu0 0
    %2763 = vmatpush1.bf16.msra.mxu0 %v2744
    %2764 = vmatprep.subr.bf16.mxu0 0
    %2765 = vmatpush1.bf16.msra.mxu0 %v2745
    %2766 = vmatprep.subr.bf16.mxu0 0
    %2767 = vmatpush1.bf16.msra.mxu0 %v2746
    %2768 = vmatprep.subr.bf16.mxu0 0
    %2769 = vmatpush1.bf16.msra.mxu0 %v2747
    %2770 = vmatprep.subr.bf16.mxu0 0
    %2771 = vmatpush1.bf16.msra.mxu0 %v2748
    %2772 = vmatprep.subr.bf16.mxu0 0
    %2773 = vmatpush1.bf16.msra.mxu0 %v2749
    %2774 = vmatprep.subr.bf16.mxu0 0
    %2775 = vmatpush1.bf16.msra.mxu0 0
    %2776 = vmatprep.subr.bf16.mxu0 0
    %2777 = vmatpush1.bf16.msra.mxu0 0
    %2778 = vmatprep.subr.bf16.mxu0 0
    %2779 = vmatpush1.bf16.msra.mxu0 0
    %2780 = vmatprep.subr.bf16.mxu0 0
    %2781 = vmatpush1.bf16.msra.mxu0 0
    %2782 = vmatprep.subr.bf16.mxu0 0
    %2783 = vmatpush1.bf16.msra.mxu0 0
    %2784 = vmatprep.subr.bf16.mxu0 0
    %2785 = vmatpush1.bf16.msra.mxu0 0
    %2786 = vmatprep.subr.bf16.mxu0 0
    %2787 = vmatpush1.bf16.msra.mxu0 0
    %2788 = vmatprep.subr.bf16.mxu0 0
    %2789 = vmatpush1.bf16.msra.mxu0 0
    %2790 = vmatprep.mubr.bf16.mxu0 0
    %2791 = vmatmul.mubr.bf16.gmra.mrb[0].mxu0 %v2686
    %v2792 = vpop.f32.mrb[0].mxu0
    %v2793 = vadd.f32 %v2708, %v2792
    %v2794 = vpop.f32.mrb[0].mxu0
    %v2795 = vpop.f32.mrb[0].mxu0
    %v2796 = vpop.f32.mrb[0].mxu0
    %2797 = vdwg.mxu0
    %vm2798 = vcmask 484352
    %2799 = vst.msk [vmem:[#allocation8] sm:$0x3] %vm2798, %v2793
    // Predicated region
    $region50: #{tpu_custom_call.1} parent=1 // pred_check
      _
    $region51: #{tpu_custom_call.1} parent=1 // pred_check_branch
      %2801 = sbr.rel (0) target = $region53
    $region52: #{tpu_custom_call.1} parent=1 // pred_region
      %s2803 = ssub.s32 32, 32
      %2804 = vsyncadd [#allocation4], %s2803
      %s2806 = sshll.u32 [#allocation8], 4
      %s2807 = int_to_ptr.vmem [resolvable:$true] %s2806
      %2809 = dma.vmem_to_hbm [thread:$0]  %s2807, 32, %s9, [#allocation4]
    $region53: #{tpu_custom_call.1} parent=1 // pred_fallthru
      _
    // Predicated region
    $region54: #{tpu_custom_call.1} parent=1 // pred_check
      _
    $region55: #{tpu_custom_call.1} parent=1 // pred_check_branch
      %2811 = sbr.rel (0) target = $region57
    $region56: #{tpu_custom_call.1} parent=1 // pred_region
      %2812 = dma.done [#allocation4], 32
    $region57: #{tpu_custom_call.1} parent=1 // pred_fallthru
      _
    %2813 = vsyncpa [#allocation3], 1
    %2814 = vsyncpa [#allocation6], 1
    %2815 = vsyncpa [#allocation4], 1

</llo_original>
